<compile_context>
chip_gen: v6e
topology: v6e:2x2x1
jax: 0.10.0
libtpu: 0.0.40
codegen_flags: <defaults>
</compile_context>

<pallas_src>
import functools

import jax
import jax.numpy as jnp
from jax.experimental import pallas as pl
from jax.experimental.pallas import tpu as pltpu


def _lstm_kernel(xg_ref, whh_ref, h0_ref, c0_ref,
                 out_ref, c_out_ref,
                 h_sc, c_sc, *, hidden, chunk):
    """One grid step = `chunk` LSTM timesteps for one batch block.

    xg_ref  : (bb, chunk*4H)  precomputed x_t @ W_ih^T + (b_ih + b_hh), flat
    whh_ref : (H, 4H)         recurrent weight (resident across grid)
    out_ref : (bb, chunk*H)   lane-dense hidden-state slab for this chunk
    c_out_ref: (bb, H)        final cell state (resident accumulator)
    h_sc/c_sc: (bb, H) f32    h/c carry across time grid steps
    """
    t = pl.program_id(1)

    @pl.when(t == 0)
    def _():
        h_sc[...] = h0_ref[...].astype(jnp.float32)
        c_sc[...] = c0_ref[...].astype(jnp.float32)

    H = hidden
    G = 4 * H
    w = whh_ref[...]            # (H, 4H); f32 or bf16 depending on matmul_dtype
    h = h_sc[...]               # (bb, H) f32 carry
    c = c_sc[...]

    # Hoisted lane mask: tanh on the g-gate lanes, sigmoid elsewhere.
    lane = jax.lax.broadcasted_iota(jnp.int32, (h.shape[0], G), 1)
    is_g = (lane >= 2 * H) & (lane < 3 * H)

    for s in range(chunk):      # static unroll: chunk is small, slices static
        pre = xg_ref[:, s * G:(s + 1) * G].astype(jnp.float32) + jnp.dot(
            h.astype(w.dtype), w, preferred_element_type=jnp.float32)
        # One full-width sigmoid + one full-width tanh (2 EUP pushes/step)
        # instead of 4 quarter-width activations on the serial critical path.
        act = jnp.where(is_g, jnp.tanh(pre), jax.nn.sigmoid(pre))
        i_g = act[:, 0 * H:1 * H]
        f_g = act[:, 1 * H:2 * H]
        g_g = act[:, 2 * H:3 * H]
        o_g = act[:, 3 * H:4 * H]
        c = f_g * c + i_g * g_g
        h = o_g * jnp.tanh(c)
        # Per-step lane-dense store: no end-of-chunk concat, O(1) vreg live set.
        out_ref[:, s * H:(s + 1) * H] = h.astype(out_ref.dtype)

    h_sc[...] = h
    c_sc[...] = c
    # Resident output (same block index across the time axis) -> one writeback.
    c_out_ref[...] = c.astype(c_out_ref.dtype)


def _pick_chunk(B, T, H, gate_itemsize, out_itemsize, budget=12 << 20):
    """Largest divisor Tc of T whose pipelined buffers fit the VMEM budget,
    preferring lane-dense (Tc*H % 128 == 0) chunks and, for long sequences,
    a grid of at least 4 chunks so the xg DMA overlaps the recurrence."""
    def need(tc):
        # double-buffered gate slab + double-buffered output block per block
        return 2 * B * tc * 4 * H * gate_itemsize + 2 * B * tc * H * out_itemsize

    divisors = [tc for tc in range(1, T + 1) if T % tc == 0]
    fits = [tc for tc in divisors if need(tc) <= budget]
    if not fits:
        return 1
    dense = [tc for tc in fits if (tc * H) % 128 == 0]
    min_grid = 4 if T >= 64 else 1
    pool = dense or fits
    pref = [tc for tc in pool if T // tc >= min_grid]
    return max(pref or pool)


def lstm_forward(sequence, params, hc=None, *, chunk=None, batch_block=None,
                 matmul_dtype=None, gate_dtype=None):
    """sequence: (B, T, D) batch_first. Returns (out, (h, c)) like nn.LSTM.

    matmul_dtype: optional narrow dtype (e.g. bf16) for MXU inputs — valid on
      all TPU generations; carries and gate math stay f32.
    gate_dtype:   optional narrow dtype for the HBM-resident gate slab.
    """
    w_ih, w_hh, b_ih, b_hh = params          # (4H,D), (4H,H), (4H,), (4H,)
    B, T, D = sequence.shape
    H = w_hh.shape[1]
    dtype = sequence.dtype

    if hc is None:
        h0 = jnp.zeros((B, H), jnp.float32)
        c0 = jnp.zeros((B, H), jnp.float32)
    else:
        h, c = hc                             # (1, B, H) each, PyTorch conv.
        h0 = h[0]                             # kept in own dtype; cast to the
        c0 = c[0]                             # f32 scratch inside the kernel

    wih_t = w_ih.T                            # (D, 4H)
    whh_t = w_hh.T                            # (H, 4H)
    bias = (b_ih + b_hh).astype(jnp.float32)  # (4H,)

    x_mm = sequence
    if matmul_dtype is not None:
        x_mm = x_mm.astype(matmul_dtype)
        wih_t = wih_t.astype(matmul_dtype)
        whh_t = whh_t.astype(matmul_dtype)

    # Hoisted input projection for ALL timesteps: one big matmul that fills
    # the MXU; f32 accumulation, then flat (B, T*4H) lane-dense slab.
    xg = (jnp.dot(x_mm.reshape(B * T, D), wih_t,
                  preferred_element_type=jnp.float32)
          + bias).reshape(B, T * 4 * H)
    if gate_dtype is not None:                # narrow HBM storage (v5e BW win)
        xg = xg.astype(gate_dtype)

    out_itemsize = jnp.dtype(dtype).itemsize
    Tc = chunk if chunk is not None else _pick_chunk(
        B, T, H, xg.dtype.itemsize, out_itemsize)
    assert T % Tc == 0, "chunk must divide T"

    bb = batch_block if batch_block is not None else B
    assert B % bb == 0 and (bb == B or bb % 8 == 0), \
        "batch_block must divide B and be a multiple of 8 (or equal B)"

    kernel = functools.partial(_lstm_kernel, hidden=H, chunk=Tc)

    # Rough working-set estimate; only raise the scoped VMEM limit if needed.
    est_vmem = (2 * bb * Tc * 4 * H * xg.dtype.itemsize
                + 2 * bb * Tc * H * out_itemsize
                + 2 * H * 4 * H * whh_t.dtype.itemsize
                + 8 * bb * H * 4)
    cp_kwargs = dict(dimension_semantics=("parallel", "arbitrary"))
    if est_vmem > (24 << 20):
        cp_kwargs["vmem_limit_bytes"] = min(int(est_vmem * 3 // 2), 100 << 20)

    out_flat, c_n = pl.pallas_call(
        kernel,
        out_shape=(
            jax.ShapeDtypeStruct((B, T * H), dtype),   # hidden states (flat)
            jax.ShapeDtypeStruct((B, H), dtype),       # final c
        ),
        grid_spec=pltpu.PrefetchScalarGridSpec(
            num_scalar_prefetch=0,
            grid=(B // bb, T // Tc),
            in_specs=[
                pl.BlockSpec((bb, Tc * 4 * H), lambda b, t: (b, t)),  # xg slab
                pl.BlockSpec((H, 4 * H), lambda b, t: (0, 0)),        # W_hh^T
                pl.BlockSpec((bb, H), lambda b, t: (b, 0)),           # h0
                pl.BlockSpec((bb, H), lambda b, t: (b, 0)),           # c0
            ],
            out_specs=[
                pl.BlockSpec((bb, Tc * H), lambda b, t: (b, t)),      # out chunk
                pl.BlockSpec((bb, H), lambda b, t: (b, 0)),           # c_n
            ],
            scratch_shapes=[
                pltpu.VMEM((bb, H), jnp.float32),                     # h carry
                pltpu.VMEM((bb, H), jnp.float32),                     # c carry
            ],
        ),
        compiler_params=pltpu.CompilerParams(**cp_kwargs),
    )(xg, whh_t, h0, c0)

    out = out_flat.reshape(B, T, H)            # free row-major reshape
    h_n = out[:, -1, :]                        # final hidden == last output
    return out, (h_n[None], c_n[None, :, :])


def _reference_lstm(sequence, params, hc=None):
    """Pure-JAX reference (lax.scan) for correctness check."""
    w_ih, w_hh, b_ih, b_hh = params
    B, T, D = sequence.shape
    H = w_hh.shape[1]
    if hc is None:
        h0 = jnp.zeros((B, H), jnp.float32)
        c0 = jnp.zeros((B, H), jnp.float32)
    else:
        h0, c0 = hc[0][0], hc[1][0]

    def step(carry, x_t):
        h, c = carry
        gates = x_t @ w_ih.T + b_ih + h @ w_hh.T + b_hh
        i, f, g, o = jnp.split(gates, 4, axis=-1)
        c_new = jax.nn.sigmoid(f) * c + jax.nn.sigmoid(i) * jnp.tanh(g)
        h_new = jax.nn.sigmoid(o) * jnp.tanh(c_new)
        return (h_new, c_new), h_new

    (h_n, c_n), outs = jax.lax.scan(step, (h0, c0),
                                    jnp.transpose(sequence, (1, 0, 2)))
    return jnp.transpose(outs, (1, 0, 2)), (h_n[None], c_n[None])


def init_lstm_params(key, input_dim, hidden_dim, dtype=jnp.float32):
    """xavier_normal_ on weights (as in the module), PyTorch-default
    uniform(-1/sqrt(H), 1/sqrt(H)) on biases."""
    k1, k2, k3, k4 = jax.random.split(key, 4)

    def xavier_normal(k, shape):
        fan_out, fan_in = shape
        std = (2.0 / (fan_in + fan_out)) ** 0.5
        return std * jax.random.normal(k, shape, dtype)

    bound = 1.0 / (hidden_dim ** 0.5)
    w_ih = xavier_normal(k1, (4 * hidden_dim, input_dim))
    w_hh = xavier_normal(k2, (4 * hidden_dim, hidden_dim))
    b_ih = jax.random.uniform(k3, (4 * hidden_dim,), dtype, -bound, bound)
    b_hh = jax.random.uniform(k4, (4 * hidden_dim,), dtype, -bound, bound)
    return w_ih, w_hh, b_ih, b_hh


if __name__ == "__main__":
    config = {"input_dim": 16, "output_dim": 32, "dropout": 0.0,
              "bidirectional": False}
    B, T = 2, 16
    D, H = config["input_dim"], config["output_dim"]

    key = jax.random.PRNGKey(0)
    kx, kp, kh, kc = jax.random.split(key, 4)
    sequence = jax.random.normal(kx, (B, T, D), jnp.float32)
    params = init_lstm_params(kp, D, H)

    # f32 path, default chunk (whole 16-step sequence in one grid step)
    out, (h, c) = jax.block_until_ready(lstm_forward(sequence, params))
    out_ref, (h_ref, c_ref) = _reference_lstm(sequence, params)
    assert out.shape == (B, T, H) and h.shape == (1, B, H) and c.shape == (1, B, H)
    assert jnp.allclose(out, out_ref, atol=1e-5, rtol=1e-5)
    assert jnp.allclose(h, h_ref, atol=1e-5, rtol=1e-5)
    assert jnp.allclose(c, c_ref, atol=1e-5, rtol=1e-5)

    # f32 path with provided (h0, c0) and chunk=8 (carry across grid steps)
    h0 = 0.1 * jax.random.normal(kh, (1, B, H), jnp.float32)
    c0 = 0.1 * jax.random.normal(kc, (1, B, H), jnp.float32)
    out2, (h2, c2) = jax.block_until_ready(
        lstm_forward(sequence, params, (h0, c0), chunk=8))
    out2_ref, (h2_ref, c2_ref) = _reference_lstm(sequence, params, (h0, c0))
    assert jnp.allclose(out2, out2_ref, atol=1e-5, rtol=1e-5)
    assert jnp.allclose(h2, h2_ref, atol=1e-5, rtol=1e-5)
    assert jnp.allclose(c2, c2_ref, atol=1e-5, rtol=1e-5)

    # bf16 MXU inputs + bf16 HBM gate slab (valid on all generations);
    # f32 carry & gate math in-kernel -> loose check.
    out_bf, _ = jax.block_until_ready(
        lstm_forward(sequence, params, matmul_dtype=jnp.bfloat16,
                     gate_dtype=jnp.bfloat16))
    assert out_bf.shape == (B, T, H)
    assert jnp.allclose(out_bf, out_ref, atol=2e-1, rtol=2e-1)

    print("KERNEL_OK")
</pallas_src>

<mosaic_0001>
module attributes {stable_mosaic.version = 11 : i64} {
  func.func @_lstm_kernel(%arg0: i32, %arg1: i32, %arg2: memref<2x2048xf32, #tpu.memory_space<vmem>>, %arg3: memref<32x128xf32, #tpu.memory_space<vmem>>, %arg4: memref<2x32xf32, #tpu.memory_space<vmem>>, %arg5: memref<2x32xf32, #tpu.memory_space<vmem>>, %arg6: memref<2x512xf32, #tpu.memory_space<vmem>>, %arg7: memref<2x32xf32, #tpu.memory_space<vmem>>, %arg8: memref<2x32xf32, #tpu.memory_space<vmem>>, %arg9: memref<2x32xf32, #tpu.memory_space<vmem>>) attributes {dimension_semantics = [#tpu.dimension_semantics<parallel>, #tpu.dimension_semantics<arbitrary>], iteration_bounds = array<i64: 1, 1>, scalar_prefetch = 0 : i64, scratch_operands = 2 : i64, tpu.core_type = #tpu.core_type<tc>, window_params = [{transform_indices = @transform_0, window_bounds = array<i64: 2, 2048>}, {pipeline_mode = #tpu.pipeline_mode<synchronous>, transform_indices = @transform_1, window_bounds = array<i64: 32, 128>}, {transform_indices = @transform_2, window_bounds = array<i64: 2, 32>}, {transform_indices = @transform_3, window_bounds = array<i64: 2, 32>}, {transform_indices = @transform_4, window_bounds = array<i64: 2, 512>}, {transform_indices = @transform_5, window_bounds = array<i64: 2, 32>}]} {
    %c0_i32 = arith.constant 0 : i32
    %0 = arith.cmpi eq, %arg1, %c0_i32 : i32
    %1 = arith.extui %0 : i1 to i32
    %c0_i32_0 = arith.constant 0 : i32
    %2 = arith.cmpi ne, %1, %c0_i32_0 : i32
    scf.if %2 {
      %c0_80 = arith.constant 0 : index
      %c0_81 = arith.constant 0 : index
      %335 = vector.load %arg4[%c0_80, %c0_81] : memref<2x32xf32, #tpu.memory_space<vmem>>, vector<2x32xf32>
      %c0_82 = arith.constant 0 : index
      %c0_83 = arith.constant 0 : index
      %336 = vector.load %arg8[%c0_82, %c0_83] : memref<2x32xf32, #tpu.memory_space<vmem>>, vector<2x32xf32>
      tpu.vector_store %arg8[%c0_82, %c0_83], %335 {strides = array<i32>} : memref<2x32xf32, #tpu.memory_space<vmem>>, vector<2x32xf32>,
      %c0_84 = arith.constant 0 : index
      %c0_85 = arith.constant 0 : index
      %337 = vector.load %arg5[%c0_84, %c0_85] : memref<2x32xf32, #tpu.memory_space<vmem>>, vector<2x32xf32>
      %c0_86 = arith.constant 0 : index
      %c0_87 = arith.constant 0 : index
      %338 = vector.load %arg9[%c0_86, %c0_87] : memref<2x32xf32, #tpu.memory_space<vmem>>, vector<2x32xf32>
      tpu.vector_store %arg9[%c0_86, %c0_87], %337 {strides = array<i32>} : memref<2x32xf32, #tpu.memory_space<vmem>>, vector<2x32xf32>,
    } else {
    }
    %c0 = arith.constant 0 : index
    %c0_1 = arith.constant 0 : index
    %3 = vector.load %arg3[%c0, %c0_1] : memref<32x128xf32, #tpu.memory_space<vmem>>, vector<32x128xf32>
    %c0_2 = arith.constant 0 : index
    %c0_3 = arith.constant 0 : index
    %4 = vector.load %arg8[%c0_2, %c0_3] : memref<2x32xf32, #tpu.memory_space<vmem>>, vector<2x32xf32>
    %c0_4 = arith.constant 0 : index
    %c0_5 = arith.constant 0 : index
    %5 = vector.load %arg9[%c0_4, %c0_5] : memref<2x32xf32, #tpu.memory_space<vmem>>, vector<2x32xf32>
    %6 = tpu.iota {dimensions = array<i32: 1>} : vector<2x128xi32>
    %c64_i32 = arith.constant 64 : i32
    %7 = vector.broadcast %c64_i32 : i32 to vector<2x128xi32>
    %8 = arith.cmpi sge, %6, %7 : vector<2x128xi32>
    %c96_i32 = arith.constant 96 : i32
    %9 = vector.broadcast %c96_i32 : i32 to vector<2x128xi32>
    %10 = arith.cmpi slt, %6, %9 : vector<2x128xi32>
    %11 = arith.andi %8, %10 : vector<2x128xi1>
    %c0_6 = arith.constant 0 : index
    %c0_7 = arith.constant 0 : index
    %12 = vector.load %arg2[%c0_6, %c0_7] : memref<2x2048xf32, #tpu.memory_space<vmem>>, vector<2x128xf32>
    %cst = arith.constant dense<0.000000e+00> : vector<2x128xf32>
    %13 = tpu.matmul %4, %3, %cst {dimension_numbers = #tpu.dot_dimension_numbers<[1], [0], [0], [1], [0, 0, 1, 1], [], []>} : vector<2x32xf32>, vector<32x128xf32>, vector<2x128xf32> -> vector<2x128xf32>
    %14 = arith.addf %12, %13 : vector<2x128xf32>
    %15 = math.tanh %14 : vector<2x128xf32>
    %16 = arith.negf %14 : vector<2x128xf32>
    %17 = math.exp %16 : vector<2x128xf32>
    %cst_8 = arith.constant 1.000000e+00 : f32
    %18 = vector.broadcast %cst_8 : f32 to vector<2x128xf32>
    %19 = arith.addf %18, %17 : vector<2x128xf32>
    %20 = arith.divf %18, %19 : vector<2x128xf32>
    %21 = arith.select %11, %15, %20 : vector<2x128xi1>, vector<2x128xf32>
    %22 = vector.extract_strided_slice %21 {offsets = [0, 0], sizes = [2, 32], strides = [1, 1]} : vector<2x128xf32> to vector<2x32xf32>
    %23 = vector.extract_strided_slice %21 {offsets = [0, 32], sizes = [2, 32], strides = [1, 1]} : vector<2x128xf32> to vector<2x32xf32>
    %24 = vector.extract_strided_slice %21 {offsets = [0, 64], sizes = [2, 32], strides = [1, 1]} : vector<2x128xf32> to vector<2x32xf32>
    %25 = vector.extract_strided_slice %21 {offsets = [0, 96], sizes = [2, 32], strides = [1, 1]} : vector<2x128xf32> to vector<2x32xf32>
    %26 = arith.mulf %23, %5 : vector<2x32xf32>
    %27 = arith.mulf %22, %24 : vector<2x32xf32>
    %28 = arith.addf %26, %27 : vector<2x32xf32>
    %29 = math.tanh %28 : vector<2x32xf32>
    %30 = arith.mulf %25, %29 : vector<2x32xf32>
    %c0_9 = arith.constant 0 : index
    %c0_10 = arith.constant 0 : index
    %31 = vector.load %arg6[%c0_9, %c0_10] : memref<2x512xf32, #tpu.memory_space<vmem>>, vector<2x32xf32>
    tpu.vector_store %arg6[%c0_9, %c0_10], %30 {strides = array<i32>} : memref<2x512xf32, #tpu.memory_space<vmem>>, vector<2x32xf32>,
    %c0_11 = arith.constant 0 : index
    %c128 = arith.constant 128 : index
    %32 = vector.load %arg2[%c0_11, %c128] : memref<2x2048xf32, #tpu.memory_space<vmem>>, vector<2x128xf32>
    %cst_12 = arith.constant dense<0.000000e+00> : vector<2x128xf32>
    %33 = tpu.matmul %30, %3, %cst_12 {dimension_numbers = #tpu.dot_dimension_numbers<[1], [0], [0], [1], [0, 0, 1, 1], [], []>} : vector<2x32xf32>, vector<32x128xf32>, vector<2x128xf32> -> vector<2x128xf32>
    %34 = arith.addf %32, %33 : vector<2x128xf32>
    %35 = math.tanh %34 : vector<2x128xf32>
    %36 = arith.negf %34 : vector<2x128xf32>
    %37 = math.exp %36 : vector<2x128xf32>
    %cst_13 = arith.constant 1.000000e+00 : f32
    %38 = vector.broadcast %cst_13 : f32 to vector<2x128xf32>
    %39 = arith.addf %38, %37 : vector<2x128xf32>
    %40 = arith.divf %38, %39 : vector<2x128xf32>
    %41 = arith.select %11, %35, %40 : vector<2x128xi1>, vector<2x128xf32>
    %42 = vector.extract_strided_slice %41 {offsets = [0, 0], sizes = [2, 32], strides = [1, 1]} : vector<2x128xf32> to vector<2x32xf32>
    %43 = vector.extract_strided_slice %41 {offsets = [0, 32], sizes = [2, 32], strides = [1, 1]} : vector<2x128xf32> to vector<2x32xf32>
    %44 = vector.extract_strided_slice %41 {offsets = [0, 64], sizes = [2, 32], strides = [1, 1]} : vector<2x128xf32> to vector<2x32xf32>
    %45 = vector.extract_strided_slice %41 {offsets = [0, 96], sizes = [2, 32], strides = [1, 1]} : vector<2x128xf32> to vector<2x32xf32>
    %46 = arith.mulf %43, %28 : vector<2x32xf32>
    %47 = arith.mulf %42, %44 : vector<2x32xf32>
    %48 = arith.addf %46, %47 : vector<2x32xf32>
    %49 = math.tanh %48 : vector<2x32xf32>
    %50 = arith.mulf %45, %49 : vector<2x32xf32>
    %c0_14 = arith.constant 0 : index
    %c32 = arith.constant 32 : index
    %51 = vector.load %arg6[%c0_14, %c32] : memref<2x512xf32, #tpu.memory_space<vmem>>, vector<2x32xf32>
    tpu.vector_store %arg6[%c0_14, %c32], %50 {strides = array<i32>} : memref<2x512xf32, #tpu.memory_space<vmem>>, vector<2x32xf32>,
    %c0_15 = arith.constant 0 : index
    %c256 = arith.constant 256 : index
    %52 = vector.load %arg2[%c0_15, %c256] : memref<2x2048xf32, #tpu.memory_space<vmem>>, vector<2x128xf32>
    %cst_16 = arith.constant dense<0.000000e+00> : vector<2x128xf32>
    %53 = tpu.matmul %50, %3, %cst_16 {dimension_numbers = #tpu.dot_dimension_numbers<[1], [0], [0], [1], [0, 0, 1, 1], [], []>} : vector<2x32xf32>, vector<32x128xf32>, vector<2x128xf32> -> vector<2x128xf32>
    %54 = arith.addf %52, %53 : vector<2x128xf32>
    %55 = math.tanh %54 : vector<2x128xf32>
    %56 = arith.negf %54 : vector<2x128xf32>
    %57 = math.exp %56 : vector<2x128xf32>
    %cst_17 = arith.constant 1.000000e+00 : f32
    %58 = vector.broadcast %cst_17 : f32 to vector<2x128xf32>
    %59 = arith.addf %58, %57 : vector<2x128xf32>
    %60 = arith.divf %58, %59 : vector<2x128xf32>
    %61 = arith.select %11, %55, %60 : vector<2x128xi1>, vector<2x128xf32>
    %62 = vector.extract_strided_slice %61 {offsets = [0, 0], sizes = [2, 32], strides = [1, 1]} : vector<2x128xf32> to vector<2x32xf32>
    %63 = vector.extract_strided_slice %61 {offsets = [0, 32], sizes = [2, 32], strides = [1, 1]} : vector<2x128xf32> to vector<2x32xf32>
    %64 = vector.extract_strided_slice %61 {offsets = [0, 64], sizes = [2, 32], strides = [1, 1]} : vector<2x128xf32> to vector<2x32xf32>
    %65 = vector.extract_strided_slice %61 {offsets = [0, 96], sizes = [2, 32], strides = [1, 1]} : vector<2x128xf32> to vector<2x32xf32>
    %66 = arith.mulf %63, %48 : vector<2x32xf32>
    %67 = arith.mulf %62, %64 : vector<2x32xf32>
    %68 = arith.addf %66, %67 : vector<2x32xf32>
    %69 = math.tanh %68 : vector<2x32xf32>
    %70 = arith.mulf %65, %69 : vector<2x32xf32>
    %c0_18 = arith.constant 0 : index
    %c64 = arith.constant 64 : index
    %71 = vector.load %arg6[%c0_18, %c64] : memref<2x512xf32, #tpu.memory_space<vmem>>, vector<2x32xf32>
    tpu.vector_store %arg6[%c0_18, %c64], %70 {strides = array<i32>} : memref<2x512xf32, #tpu.memory_space<vmem>>, vector<2x32xf32>,
    %c0_19 = arith.constant 0 : index
    %c384 = arith.constant 384 : index
    %72 = vector.load %arg2[%c0_19, %c384] : memref<2x2048xf32, #tpu.memory_space<vmem>>, vector<2x128xf32>
    %cst_20 = arith.constant dense<0.000000e+00> : vector<2x128xf32>
    %73 = tpu.matmul %70, %3, %cst_20 {dimension_numbers = #tpu.dot_dimension_numbers<[1], [0], [0], [1], [0, 0, 1, 1], [], []>} : vector<2x32xf32>, vector<32x128xf32>, vector<2x128xf32> -> vector<2x128xf32>
    %74 = arith.addf %72, %73 : vector<2x128xf32>
    %75 = math.tanh %74 : vector<2x128xf32>
    %76 = arith.negf %74 : vector<2x128xf32>
    %77 = math.exp %76 : vector<2x128xf32>
    %cst_21 = arith.constant 1.000000e+00 : f32
    %78 = vector.broadcast %cst_21 : f32 to vector<2x128xf32>
    %79 = arith.addf %78, %77 : vector<2x128xf32>
    %80 = arith.divf %78, %79 : vector<2x128xf32>
    %81 = arith.select %11, %75, %80 : vector<2x128xi1>, vector<2x128xf32>
    %82 = vector.extract_strided_slice %81 {offsets = [0, 0], sizes = [2, 32], strides = [1, 1]} : vector<2x128xf32> to vector<2x32xf32>
    %83 = vector.extract_strided_slice %81 {offsets = [0, 32], sizes = [2, 32], strides = [1, 1]} : vector<2x128xf32> to vector<2x32xf32>
    %84 = vector.extract_strided_slice %81 {offsets = [0, 64], sizes = [2, 32], strides = [1, 1]} : vector<2x128xf32> to vector<2x32xf32>
    %85 = vector.extract_strided_slice %81 {offsets = [0, 96], sizes = [2, 32], strides = [1, 1]} : vector<2x128xf32> to vector<2x32xf32>
    %86 = arith.mulf %83, %68 : vector<2x32xf32>
    %87 = arith.mulf %82, %84 : vector<2x32xf32>
    %88 = arith.addf %86, %87 : vector<2x32xf32>
    %89 = math.tanh %88 : vector<2x32xf32>
    %90 = arith.mulf %85, %89 : vector<2x32xf32>
    %c0_22 = arith.constant 0 : index
    %c96 = arith.constant 96 : index
    %91 = vector.load %arg6[%c0_22, %c96] : memref<2x512xf32, #tpu.memory_space<vmem>>, vector<2x32xf32>
    tpu.vector_store %arg6[%c0_22, %c96], %90 {strides = array<i32>} : memref<2x512xf32, #tpu.memory_space<vmem>>, vector<2x32xf32>,
    %c0_23 = arith.constant 0 : index
    %c512 = arith.constant 512 : index
    %92 = vector.load %arg2[%c0_23, %c512] : memref<2x2048xf32, #tpu.memory_space<vmem>>, vector<2x128xf32>
    %cst_24 = arith.constant dense<0.000000e+00> : vector<2x128xf32>
    %93 = tpu.matmul %90, %3, %cst_24 {dimension_numbers = #tpu.dot_dimension_numbers<[1], [0], [0], [1], [0, 0, 1, 1], [], []>} : vector<2x32xf32>, vector<32x128xf32>, vector<2x128xf32> -> vector<2x128xf32>
    %94 = arith.addf %92, %93 : vector<2x128xf32>
    %95 = math.tanh %94 : vector<2x128xf32>
    %96 = arith.negf %94 : vector<2x128xf32>
    %97 = math.exp %96 : vector<2x128xf32>
    %cst_25 = arith.constant 1.000000e+00 : f32
    %98 = vector.broadcast %cst_25 : f32 to vector<2x128xf32>
    %99 = arith.addf %98, %97 : vector<2x128xf32>
    %100 = arith.divf %98, %99 : vector<2x128xf32>
    %101 = arith.select %11, %95, %100 : vector<2x128xi1>, vector<2x128xf32>
    %102 = vector.extract_strided_slice %101 {offsets = [0, 0], sizes = [2, 32], strides = [1, 1]} : vector<2x128xf32> to vector<2x32xf32>
    %103 = vector.extract_strided_slice %101 {offsets = [0, 32], sizes = [2, 32], strides = [1, 1]} : vector<2x128xf32> to vector<2x32xf32>
    %104 = vector.extract_strided_slice %101 {offsets = [0, 64], sizes = [2, 32], strides = [1, 1]} : vector<2x128xf32> to vector<2x32xf32>
    %105 = vector.extract_strided_slice %101 {offsets = [0, 96], sizes = [2, 32], strides = [1, 1]} : vector<2x128xf32> to vector<2x32xf32>
    %106 = arith.mulf %103, %88 : vector<2x32xf32>
    %107 = arith.mulf %102, %104 : vector<2x32xf32>
    %108 = arith.addf %106, %107 : vector<2x32xf32>
    %109 = math.tanh %108 : vector<2x32xf32>
    %110 = arith.mulf %105, %109 : vector<2x32xf32>
    %c0_26 = arith.constant 0 : index
    %c128_27 = arith.constant 128 : index
    %111 = vector.load %arg6[%c0_26, %c128_27] : memref<2x512xf32, #tpu.memory_space<vmem>>, vector<2x32xf32>
    tpu.vector_store %arg6[%c0_26, %c128_27], %110 {strides = array<i32>} : memref<2x512xf32, #tpu.memory_space<vmem>>, vector<2x32xf32>,
    %c0_28 = arith.constant 0 : index
    %c640 = arith.constant 640 : index
    %112 = vector.load %arg2[%c0_28, %c640] : memref<2x2048xf32, #tpu.memory_space<vmem>>, vector<2x128xf32>
    %cst_29 = arith.constant dense<0.000000e+00> : vector<2x128xf32>
    %113 = tpu.matmul %110, %3, %cst_29 {dimension_numbers = #tpu.dot_dimension_numbers<[1], [0], [0], [1], [0, 0, 1, 1], [], []>} : vector<2x32xf32>, vector<32x128xf32>, vector<2x128xf32> -> vector<2x128xf32>
    %114 = arith.addf %112, %113 : vector<2x128xf32>
    %115 = math.tanh %114 : vector<2x128xf32>
    %116 = arith.negf %114 : vector<2x128xf32>
    %117 = math.exp %116 : vector<2x128xf32>
    %cst_30 = arith.constant 1.000000e+00 : f32
    %118 = vector.broadcast %cst_30 : f32 to vector<2x128xf32>
    %119 = arith.addf %118, %117 : vector<2x128xf32>
    %120 = arith.divf %118, %119 : vector<2x128xf32>
    %121 = arith.select %11, %115, %120 : vector<2x128xi1>, vector<2x128xf32>
    %122 = vector.extract_strided_slice %121 {offsets = [0, 0], sizes = [2, 32], strides = [1, 1]} : vector<2x128xf32> to vector<2x32xf32>
    %123 = vector.extract_strided_slice %121 {offsets = [0, 32], sizes = [2, 32], strides = [1, 1]} : vector<2x128xf32> to vector<2x32xf32>
    %124 = vector.extract_strided_slice %121 {offsets = [0, 64], sizes = [2, 32], strides = [1, 1]} : vector<2x128xf32> to vector<2x32xf32>
    %125 = vector.extract_strided_slice %121 {offsets = [0, 96], sizes = [2, 32], strides = [1, 1]} : vector<2x128xf32> to vector<2x32xf32>
    %126 = arith.mulf %123, %108 : vector<2x32xf32>
    %127 = arith.mulf %122, %124 : vector<2x32xf32>
    %128 = arith.addf %126, %127 : vector<2x32xf32>
    %129 = math.tanh %128 : vector<2x32xf32>
    %130 = arith.mulf %125, %129 : vector<2x32xf32>
    %c0_31 = arith.constant 0 : index
    %c160 = arith.constant 160 : index
    %131 = vector.load %arg6[%c0_31, %c160] : memref<2x512xf32, #tpu.memory_space<vmem>>, vector<2x32xf32>
    tpu.vector_store %arg6[%c0_31, %c160], %130 {strides = array<i32>} : memref<2x512xf32, #tpu.memory_space<vmem>>, vector<2x32xf32>,
    %c0_32 = arith.constant 0 : index
    %c768 = arith.constant 768 : index
    %132 = vector.load %arg2[%c0_32, %c768] : memref<2x2048xf32, #tpu.memory_space<vmem>>, vector<2x128xf32>
    %cst_33 = arith.constant dense<0.000000e+00> : vector<2x128xf32>
    %133 = tpu.matmul %130, %3, %cst_33 {dimension_numbers = #tpu.dot_dimension_numbers<[1], [0], [0], [1], [0, 0, 1, 1], [], []>} : vector<2x32xf32>, vector<32x128xf32>, vector<2x128xf32> -> vector<2x128xf32>
    %134 = arith.addf %132, %133 : vector<2x128xf32>
    %135 = math.tanh %134 : vector<2x128xf32>
    %136 = arith.negf %134 : vector<2x128xf32>
    %137 = math.exp %136 : vector<2x128xf32>
    %cst_34 = arith.constant 1.000000e+00 : f32
    %138 = vector.broadcast %cst_34 : f32 to vector<2x128xf32>
    %139 = arith.addf %138, %137 : vector<2x128xf32>
    %140 = arith.divf %138, %139 : vector<2x128xf32>
    %141 = arith.select %11, %135, %140 : vector<2x128xi1>, vector<2x128xf32>
    %142 = vector.extract_strided_slice %141 {offsets = [0, 0], sizes = [2, 32], strides = [1, 1]} : vector<2x128xf32> to vector<2x32xf32>
    %143 = vector.extract_strided_slice %141 {offsets = [0, 32], sizes = [2, 32], strides = [1, 1]} : vector<2x128xf32> to vector<2x32xf32>
    %144 = vector.extract_strided_slice %141 {offsets = [0, 64], sizes = [2, 32], strides = [1, 1]} : vector<2x128xf32> to vector<2x32xf32>
    %145 = vector.extract_strided_slice %141 {offsets = [0, 96], sizes = [2, 32], strides = [1, 1]} : vector<2x128xf32> to vector<2x32xf32>
    %146 = arith.mulf %143, %128 : vector<2x32xf32>
    %147 = arith.mulf %142, %144 : vector<2x32xf32>
    %148 = arith.addf %146, %147 : vector<2x32xf32>
    %149 = math.tanh %148 : vector<2x32xf32>
    %150 = arith.mulf %145, %149 : vector<2x32xf32>
    %c0_35 = arith.constant 0 : index
    %c192 = arith.constant 192 : index
    %151 = vector.load %arg6[%c0_35, %c192] : memref<2x512xf32, #tpu.memory_space<vmem>>, vector<2x32xf32>
    tpu.vector_store %arg6[%c0_35, %c192], %150 {strides = array<i32>} : memref<2x512xf32, #tpu.memory_space<vmem>>, vector<2x32xf32>,
    %c0_36 = arith.constant 0 : index
    %c896 = arith.constant 896 : index
    %152 = vector.load %arg2[%c0_36, %c896] : memref<2x2048xf32, #tpu.memory_space<vmem>>, vector<2x128xf32>
    %cst_37 = arith.constant dense<0.000000e+00> : vector<2x128xf32>
    %153 = tpu.matmul %150, %3, %cst_37 {dimension_numbers = #tpu.dot_dimension_numbers<[1], [0], [0], [1], [0, 0, 1, 1], [], []>} : vector<2x32xf32>, vector<32x128xf32>, vector<2x128xf32> -> vector<2x128xf32>
    %154 = arith.addf %152, %153 : vector<2x128xf32>
    %155 = math.tanh %154 : vector<2x128xf32>
    %156 = arith.negf %154 : vector<2x128xf32>
    %157 = math.exp %156 : vector<2x128xf32>
    %cst_38 = arith.constant 1.000000e+00 : f32
    %158 = vector.broadcast %cst_38 : f32 to vector<2x128xf32>
    %159 = arith.addf %158, %157 : vector<2x128xf32>
    %160 = arith.divf %158, %159 : vector<2x128xf32>
    %161 = arith.select %11, %155, %160 : vector<2x128xi1>, vector<2x128xf32>
    %162 = vector.extract_strided_slice %161 {offsets = [0, 0], sizes = [2, 32], strides = [1, 1]} : vector<2x128xf32> to vector<2x32xf32>
    %163 = vector.extract_strided_slice %161 {offsets = [0, 32], sizes = [2, 32], strides = [1, 1]} : vector<2x128xf32> to vector<2x32xf32>
    %164 = vector.extract_strided_slice %161 {offsets = [0, 64], sizes = [2, 32], strides = [1, 1]} : vector<2x128xf32> to vector<2x32xf32>
    %165 = vector.extract_strided_slice %161 {offsets = [0, 96], sizes = [2, 32], strides = [1, 1]} : vector<2x128xf32> to vector<2x32xf32>
    %166 = arith.mulf %163, %148 : vector<2x32xf32>
    %167 = arith.mulf %162, %164 : vector<2x32xf32>
    %168 = arith.addf %166, %167 : vector<2x32xf32>
    %169 = math.tanh %168 : vector<2x32xf32>
    %170 = arith.mulf %165, %169 : vector<2x32xf32>
    %c0_39 = arith.constant 0 : index
    %c224 = arith.constant 224 : index
    %171 = vector.load %arg6[%c0_39, %c224] : memref<2x512xf32, #tpu.memory_space<vmem>>, vector<2x32xf32>
    tpu.vector_store %arg6[%c0_39, %c224], %170 {strides = array<i32>} : memref<2x512xf32, #tpu.memory_space<vmem>>, vector<2x32xf32>,
    %c0_40 = arith.constant 0 : index
    %c1024 = arith.constant 1024 : index
    %172 = vector.load %arg2[%c0_40, %c1024] : memref<2x2048xf32, #tpu.memory_space<vmem>>, vector<2x128xf32>
    %cst_41 = arith.constant dense<0.000000e+00> : vector<2x128xf32>
    %173 = tpu.matmul %170, %3, %cst_41 {dimension_numbers = #tpu.dot_dimension_numbers<[1], [0], [0], [1], [0, 0, 1, 1], [], []>} : vector<2x32xf32>, vector<32x128xf32>, vector<2x128xf32> -> vector<2x128xf32>
    %174 = arith.addf %172, %173 : vector<2x128xf32>
    %175 = math.tanh %174 : vector<2x128xf32>
    %176 = arith.negf %174 : vector<2x128xf32>
    %177 = math.exp %176 : vector<2x128xf32>
    %cst_42 = arith.constant 1.000000e+00 : f32
    %178 = vector.broadcast %cst_42 : f32 to vector<2x128xf32>
    %179 = arith.addf %178, %177 : vector<2x128xf32>
    %180 = arith.divf %178, %179 : vector<2x128xf32>
    %181 = arith.select %11, %175, %180 : vector<2x128xi1>, vector<2x128xf32>
    %182 = vector.extract_strided_slice %181 {offsets = [0, 0], sizes = [2, 32], strides = [1, 1]} : vector<2x128xf32> to vector<2x32xf32>
    %183 = vector.extract_strided_slice %181 {offsets = [0, 32], sizes = [2, 32], strides = [1, 1]} : vector<2x128xf32> to vector<2x32xf32>
    %184 = vector.extract_strided_slice %181 {offsets = [0, 64], sizes = [2, 32], strides = [1, 1]} : vector<2x128xf32> to vector<2x32xf32>
    %185 = vector.extract_strided_slice %181 {offsets = [0, 96], sizes = [2, 32], strides = [1, 1]} : vector<2x128xf32> to vector<2x32xf32>
    %186 = arith.mulf %183, %168 : vector<2x32xf32>
    %187 = arith.mulf %182, %184 : vector<2x32xf32>
    %188 = arith.addf %186, %187 : vector<2x32xf32>
    %189 = math.tanh %188 : vector<2x32xf32>
    %190 = arith.mulf %185, %189 : vector<2x32xf32>
    %c0_43 = arith.constant 0 : index
    %c256_44 = arith.constant 256 : index
    %191 = vector.load %arg6[%c0_43, %c256_44] : memref<2x512xf32, #tpu.memory_space<vmem>>, vector<2x32xf32>
    tpu.vector_store %arg6[%c0_43, %c256_44], %190 {strides = array<i32>} : memref<2x512xf32, #tpu.memory_space<vmem>>, vector<2x32xf32>,
    %c0_45 = arith.constant 0 : index
    %c1152 = arith.constant 1152 : index
    %192 = vector.load %arg2[%c0_45, %c1152] : memref<2x2048xf32, #tpu.memory_space<vmem>>, vector<2x128xf32>
    %cst_46 = arith.constant dense<0.000000e+00> : vector<2x128xf32>
    %193 = tpu.matmul %190, %3, %cst_46 {dimension_numbers = #tpu.dot_dimension_numbers<[1], [0], [0], [1], [0, 0, 1, 1], [], []>} : vector<2x32xf32>, vector<32x128xf32>, vector<2x128xf32> -> vector<2x128xf32>
    %194 = arith.addf %192, %193 : vector<2x128xf32>
    %195 = math.tanh %194 : vector<2x128xf32>
    %196 = arith.negf %194 : vector<2x128xf32>
    %197 = math.exp %196 : vector<2x128xf32>
    %cst_47 = arith.constant 1.000000e+00 : f32
    %198 = vector.broadcast %cst_47 : f32 to vector<2x128xf32>
    %199 = arith.addf %198, %197 : vector<2x128xf32>
    %200 = arith.divf %198, %199 : vector<2x128xf32>
    %201 = arith.select %11, %195, %200 : vector<2x128xi1>, vector<2x128xf32>
    %202 = vector.extract_strided_slice %201 {offsets = [0, 0], sizes = [2, 32], strides = [1, 1]} : vector<2x128xf32> to vector<2x32xf32>
    %203 = vector.extract_strided_slice %201 {offsets = [0, 32], sizes = [2, 32], strides = [1, 1]} : vector<2x128xf32> to vector<2x32xf32>
    %204 = vector.extract_strided_slice %201 {offsets = [0, 64], sizes = [2, 32], strides = [1, 1]} : vector<2x128xf32> to vector<2x32xf32>
    %205 = vector.extract_strided_slice %201 {offsets = [0, 96], sizes = [2, 32], strides = [1, 1]} : vector<2x128xf32> to vector<2x32xf32>
    %206 = arith.mulf %203, %188 : vector<2x32xf32>
    %207 = arith.mulf %202, %204 : vector<2x32xf32>
    %208 = arith.addf %206, %207 : vector<2x32xf32>
    %209 = math.tanh %208 : vector<2x32xf32>
    %210 = arith.mulf %205, %209 : vector<2x32xf32>
    %c0_48 = arith.constant 0 : index
    %c288 = arith.constant 288 : index
    %211 = vector.load %arg6[%c0_48, %c288] : memref<2x512xf32, #tpu.memory_space<vmem>>, vector<2x32xf32>
    tpu.vector_store %arg6[%c0_48, %c288], %210 {strides = array<i32>} : memref<2x512xf32, #tpu.memory_space<vmem>>, vector<2x32xf32>,
    %c0_49 = arith.constant 0 : index
    %c1280 = arith.constant 1280 : index
    %212 = vector.load %arg2[%c0_49, %c1280] : memref<2x2048xf32, #tpu.memory_space<vmem>>, vector<2x128xf32>
    %cst_50 = arith.constant dense<0.000000e+00> : vector<2x128xf32>
    %213 = tpu.matmul %210, %3, %cst_50 {dimension_numbers = #tpu.dot_dimension_numbers<[1], [0], [0], [1], [0, 0, 1, 1], [], []>} : vector<2x32xf32>, vector<32x128xf32>, vector<2x128xf32> -> vector<2x128xf32>
    %214 = arith.addf %212, %213 : vector<2x128xf32>
    %215 = math.tanh %214 : vector<2x128xf32>
    %216 = arith.negf %214 : vector<2x128xf32>
    %217 = math.exp %216 : vector<2x128xf32>
    %cst_51 = arith.constant 1.000000e+00 : f32
    %218 = vector.broadcast %cst_51 : f32 to vector<2x128xf32>
    %219 = arith.addf %218, %217 : vector<2x128xf32>
    %220 = arith.divf %218, %219 : vector<2x128xf32>
    %221 = arith.select %11, %215, %220 : vector<2x128xi1>, vector<2x128xf32>
    %222 = vector.extract_strided_slice %221 {offsets = [0, 0], sizes = [2, 32], strides = [1, 1]} : vector<2x128xf32> to vector<2x32xf32>
    %223 = vector.extract_strided_slice %221 {offsets = [0, 32], sizes = [2, 32], strides = [1, 1]} : vector<2x128xf32> to vector<2x32xf32>
    %224 = vector.extract_strided_slice %221 {offsets = [0, 64], sizes = [2, 32], strides = [1, 1]} : vector<2x128xf32> to vector<2x32xf32>
    %225 = vector.extract_strided_slice %221 {offsets = [0, 96], sizes = [2, 32], strides = [1, 1]} : vector<2x128xf32> to vector<2x32xf32>
    %226 = arith.mulf %223, %208 : vector<2x32xf32>
    %227 = arith.mulf %222, %224 : vector<2x32xf32>
    %228 = arith.addf %226, %227 : vector<2x32xf32>
    %229 = math.tanh %228 : vector<2x32xf32>
    %230 = arith.mulf %225, %229 : vector<2x32xf32>
    %c0_52 = arith.constant 0 : index
    %c320 = arith.constant 320 : index
    %231 = vector.load %arg6[%c0_52, %c320] : memref<2x512xf32, #tpu.memory_space<vmem>>, vector<2x32xf32>
    tpu.vector_store %arg6[%c0_52, %c320], %230 {strides = array<i32>} : memref<2x512xf32, #tpu.memory_space<vmem>>, vector<2x32xf32>,
    %c0_53 = arith.constant 0 : index
    %c1408 = arith.constant 1408 : index
    %232 = vector.load %arg2[%c0_53, %c1408] : memref<2x2048xf32, #tpu.memory_space<vmem>>, vector<2x128xf32>
    %cst_54 = arith.constant dense<0.000000e+00> : vector<2x128xf32>
    %233 = tpu.matmul %230, %3, %cst_54 {dimension_numbers = #tpu.dot_dimension_numbers<[1], [0], [0], [1], [0, 0, 1, 1], [], []>} : vector<2x32xf32>, vector<32x128xf32>, vector<2x128xf32> -> vector<2x128xf32>
    %234 = arith.addf %232, %233 : vector<2x128xf32>
    %235 = math.tanh %234 : vector<2x128xf32>
    %236 = arith.negf %234 : vector<2x128xf32>
    %237 = math.exp %236 : vector<2x128xf32>
    %cst_55 = arith.constant 1.000000e+00 : f32
    %238 = vector.broadcast %cst_55 : f32 to vector<2x128xf32>
    %239 = arith.addf %238, %237 : vector<2x128xf32>
    %240 = arith.divf %238, %239 : vector<2x128xf32>
    %241 = arith.select %11, %235, %240 : vector<2x128xi1>, vector<2x128xf32>
    %242 = vector.extract_strided_slice %241 {offsets = [0, 0], sizes = [2, 32], strides = [1, 1]} : vector<2x128xf32> to vector<2x32xf32>
    %243 = vector.extract_strided_slice %241 {offsets = [0, 32], sizes = [2, 32], strides = [1, 1]} : vector<2x128xf32> to vector<2x32xf32>
    %244 = vector.extract_strided_slice %241 {offsets = [0, 64], sizes = [2, 32], strides = [1, 1]} : vector<2x128xf32> to vector<2x32xf32>
    %245 = vector.extract_strided_slice %241 {offsets = [0, 96], sizes = [2, 32], strides = [1, 1]} : vector<2x128xf32> to vector<2x32xf32>
    %246 = arith.mulf %243, %228 : vector<2x32xf32>
    %247 = arith.mulf %242, %244 : vector<2x32xf32>
    %248 = arith.addf %246, %247 : vector<2x32xf32>
    %249 = math.tanh %248 : vector<2x32xf32>
    %250 = arith.mulf %245, %249 : vector<2x32xf32>
    %c0_56 = arith.constant 0 : index
    %c352 = arith.constant 352 : index
    %251 = vector.load %arg6[%c0_56, %c352] : memref<2x512xf32, #tpu.memory_space<vmem>>, vector<2x32xf32>
    tpu.vector_store %arg6[%c0_56, %c352], %250 {strides = array<i32>} : memref<2x512xf32, #tpu.memory_space<vmem>>, vector<2x32xf32>,
    %c0_57 = arith.constant 0 : index
    %c1536 = arith.constant 1536 : index
    %252 = vector.load %arg2[%c0_57, %c1536] : memref<2x2048xf32, #tpu.memory_space<vmem>>, vector<2x128xf32>
    %cst_58 = arith.constant dense<0.000000e+00> : vector<2x128xf32>
    %253 = tpu.matmul %250, %3, %cst_58 {dimension_numbers = #tpu.dot_dimension_numbers<[1], [0], [0], [1], [0, 0, 1, 1], [], []>} : vector<2x32xf32>, vector<32x128xf32>, vector<2x128xf32> -> vector<2x128xf32>
    %254 = arith.addf %252, %253 : vector<2x128xf32>
    %255 = math.tanh %254 : vector<2x128xf32>
    %256 = arith.negf %254 : vector<2x128xf32>
    %257 = math.exp %256 : vector<2x128xf32>
    %cst_59 = arith.constant 1.000000e+00 : f32
    %258 = vector.broadcast %cst_59 : f32 to vector<2x128xf32>
    %259 = arith.addf %258, %257 : vector<2x128xf32>
    %260 = arith.divf %258, %259 : vector<2x128xf32>
    %261 = arith.select %11, %255, %260 : vector<2x128xi1>, vector<2x128xf32>
    %262 = vector.extract_strided_slice %261 {offsets = [0, 0], sizes = [2, 32], strides = [1, 1]} : vector<2x128xf32> to vector<2x32xf32>
    %263 = vector.extract_strided_slice %261 {offsets = [0, 32], sizes = [2, 32], strides = [1, 1]} : vector<2x128xf32> to vector<2x32xf32>
    %264 = vector.extract_strided_slice %261 {offsets = [0, 64], sizes = [2, 32], strides = [1, 1]} : vector<2x128xf32> to vector<2x32xf32>
    %265 = vector.extract_strided_slice %261 {offsets = [0, 96], sizes = [2, 32], strides = [1, 1]} : vector<2x128xf32> to vector<2x32xf32>
    %266 = arith.mulf %263, %248 : vector<2x32xf32>
    %267 = arith.mulf %262, %264 : vector<2x32xf32>
    %268 = arith.addf %266, %267 : vector<2x32xf32>
    %269 = math.tanh %268 : vector<2x32xf32>
    %270 = arith.mulf %265, %269 : vector<2x32xf32>
    %c0_60 = arith.constant 0 : index
    %c384_61 = arith.constant 384 : index
    %271 = vector.load %arg6[%c0_60, %c384_61] : memref<2x512xf32, #tpu.memory_space<vmem>>, vector<2x32xf32>
    tpu.vector_store %arg6[%c0_60, %c384_61], %270 {strides = array<i32>} : memref<2x512xf32, #tpu.memory_space<vmem>>, vector<2x32xf32>,
    %c0_62 = arith.constant 0 : index
    %c1664 = arith.constant 1664 : index
    %272 = vector.load %arg2[%c0_62, %c1664] : memref<2x2048xf32, #tpu.memory_space<vmem>>, vector<2x128xf32>
    %cst_63 = arith.constant dense<0.000000e+00> : vector<2x128xf32>
    %273 = tpu.matmul %270, %3, %cst_63 {dimension_numbers = #tpu.dot_dimension_numbers<[1], [0], [0], [1], [0, 0, 1, 1], [], []>} : vector<2x32xf32>, vector<32x128xf32>, vector<2x128xf32> -> vector<2x128xf32>
    %274 = arith.addf %272, %273 : vector<2x128xf32>
    %275 = math.tanh %274 : vector<2x128xf32>
    %276 = arith.negf %274 : vector<2x128xf32>
    %277 = math.exp %276 : vector<2x128xf32>
    %cst_64 = arith.constant 1.000000e+00 : f32
    %278 = vector.broadcast %cst_64 : f32 to vector<2x128xf32>
    %279 = arith.addf %278, %277 : vector<2x128xf32>
    %280 = arith.divf %278, %279 : vector<2x128xf32>
    %281 = arith.select %11, %275, %280 : vector<2x128xi1>, vector<2x128xf32>
    %282 = vector.extract_strided_slice %281 {offsets = [0, 0], sizes = [2, 32], strides = [1, 1]} : vector<2x128xf32> to vector<2x32xf32>
    %283 = vector.extract_strided_slice %281 {offsets = [0, 32], sizes = [2, 32], strides = [1, 1]} : vector<2x128xf32> to vector<2x32xf32>
    %284 = vector.extract_strided_slice %281 {offsets = [0, 64], sizes = [2, 32], strides = [1, 1]} : vector<2x128xf32> to vector<2x32xf32>
    %285 = vector.extract_strided_slice %281 {offsets = [0, 96], sizes = [2, 32], strides = [1, 1]} : vector<2x128xf32> to vector<2x32xf32>
    %286 = arith.mulf %283, %268 : vector<2x32xf32>
    %287 = arith.mulf %282, %284 : vector<2x32xf32>
    %288 = arith.addf %286, %287 : vector<2x32xf32>
    %289 = math.tanh %288 : vector<2x32xf32>
    %290 = arith.mulf %285, %289 : vector<2x32xf32>
    %c0_65 = arith.constant 0 : index
    %c416 = arith.constant 416 : index
    %291 = vector.load %arg6[%c0_65, %c416] : memref<2x512xf32, #tpu.memory_space<vmem>>, vector<2x32xf32>
    tpu.vector_store %arg6[%c0_65, %c416], %290 {strides = array<i32>} : memref<2x512xf32, #tpu.memory_space<vmem>>, vector<2x32xf32>,
    %c0_66 = arith.constant 0 : index
    %c1792 = arith.constant 1792 : index
    %292 = vector.load %arg2[%c0_66, %c1792] : memref<2x2048xf32, #tpu.memory_space<vmem>>, vector<2x128xf32>
    %cst_67 = arith.constant dense<0.000000e+00> : vector<2x128xf32>
    %293 = tpu.matmul %290, %3, %cst_67 {dimension_numbers = #tpu.dot_dimension_numbers<[1], [0], [0], [1], [0, 0, 1, 1], [], []>} : vector<2x32xf32>, vector<32x128xf32>, vector<2x128xf32> -> vector<2x128xf32>
    %294 = arith.addf %292, %293 : vector<2x128xf32>
    %295 = math.tanh %294 : vector<2x128xf32>
    %296 = arith.negf %294 : vector<2x128xf32>
    %297 = math.exp %296 : vector<2x128xf32>
    %cst_68 = arith.constant 1.000000e+00 : f32
    %298 = vector.broadcast %cst_68 : f32 to vector<2x128xf32>
    %299 = arith.addf %298, %297 : vector<2x128xf32>
    %300 = arith.divf %298, %299 : vector<2x128xf32>
    %301 = arith.select %11, %295, %300 : vector<2x128xi1>, vector<2x128xf32>
    %302 = vector.extract_strided_slice %301 {offsets = [0, 0], sizes = [2, 32], strides = [1, 1]} : vector<2x128xf32> to vector<2x32xf32>
    %303 = vector.extract_strided_slice %301 {offsets = [0, 32], sizes = [2, 32], strides = [1, 1]} : vector<2x128xf32> to vector<2x32xf32>
    %304 = vector.extract_strided_slice %301 {offsets = [0, 64], sizes = [2, 32], strides = [1, 1]} : vector<2x128xf32> to vector<2x32xf32>
    %305 = vector.extract_strided_slice %301 {offsets = [0, 96], sizes = [2, 32], strides = [1, 1]} : vector<2x128xf32> to vector<2x32xf32>
    %306 = arith.mulf %303, %288 : vector<2x32xf32>
    %307 = arith.mulf %302, %304 : vector<2x32xf32>
    %308 = arith.addf %306, %307 : vector<2x32xf32>
    %309 = math.tanh %308 : vector<2x32xf32>
    %310 = arith.mulf %305, %309 : vector<2x32xf32>
    %c0_69 = arith.constant 0 : index
    %c448 = arith.constant 448 : index
    %311 = vector.load %arg6[%c0_69, %c448] : memref<2x512xf32, #tpu.memory_space<vmem>>, vector<2x32xf32>
    tpu.vector_store %arg6[%c0_69, %c448], %310 {strides = array<i32>} : memref<2x512xf32, #tpu.memory_space<vmem>>, vector<2x32xf32>,
    %c0_70 = arith.constant 0 : index
    %c1920 = arith.constant 1920 : index
    %312 = vector.load %arg2[%c0_70, %c1920] : memref<2x2048xf32, #tpu.memory_space<vmem>>, vector<2x128xf32>
    %cst_71 = arith.constant dense<0.000000e+00> : vector<2x128xf32>
    %313 = tpu.matmul %310, %3, %cst_71 {dimension_numbers = #tpu.dot_dimension_numbers<[1], [0], [0], [1], [0, 0, 1, 1], [], []>} : vector<2x32xf32>, vector<32x128xf32>, vector<2x128xf32> -> vector<2x128xf32>
    %314 = arith.addf %312, %313 : vector<2x128xf32>
    %315 = math.tanh %314 : vector<2x128xf32>
    %316 = arith.negf %314 : vector<2x128xf32>
    %317 = math.exp %316 : vector<2x128xf32>
    %cst_72 = arith.constant 1.000000e+00 : f32
    %318 = vector.broadcast %cst_72 : f32 to vector<2x128xf32>
    %319 = arith.addf %318, %317 : vector<2x128xf32>
    %320 = arith.divf %318, %319 : vector<2x128xf32>
    %321 = arith.select %11, %315, %320 : vector<2x128xi1>, vector<2x128xf32>
    %322 = vector.extract_strided_slice %321 {offsets = [0, 0], sizes = [2, 32], strides = [1, 1]} : vector<2x128xf32> to vector<2x32xf32>
    %323 = vector.extract_strided_slice %321 {offsets = [0, 32], sizes = [2, 32], strides = [1, 1]} : vector<2x128xf32> to vector<2x32xf32>
    %324 = vector.extract_strided_slice %321 {offsets = [0, 64], sizes = [2, 32], strides = [1, 1]} : vector<2x128xf32> to vector<2x32xf32>
    %325 = vector.extract_strided_slice %321 {offsets = [0, 96], sizes = [2, 32], strides = [1, 1]} : vector<2x128xf32> to vector<2x32xf32>
    %326 = arith.mulf %323, %308 : vector<2x32xf32>
    %327 = arith.mulf %322, %324 : vector<2x32xf32>
    %328 = arith.addf %326, %327 : vector<2x32xf32>
    %329 = math.tanh %328 : vector<2x32xf32>
    %330 = arith.mulf %325, %329 : vector<2x32xf32>
    %c0_73 = arith.constant 0 : index
    %c480 = arith.constant 480 : index
    %331 = vector.load %arg6[%c0_73, %c480] : memref<2x512xf32, #tpu.memory_space<vmem>>, vector<2x32xf32>
    tpu.vector_store %arg6[%c0_73, %c480], %330 {strides = array<i32>} : memref<2x512xf32, #tpu.memory_space<vmem>>, vector<2x32xf32>,
    %c0_74 = arith.constant 0 : index
    %c0_75 = arith.constant 0 : index
    %332 = vector.load %arg8[%c0_74, %c0_75] : memref<2x32xf32, #tpu.memory_space<vmem>>, vector<2x32xf32>
    tpu.vector_store %arg8[%c0_74, %c0_75], %330 {strides = array<i32>} : memref<2x32xf32, #tpu.memory_space<vmem>>, vector<2x32xf32>,
    %c0_76 = arith.constant 0 : index
    %c0_77 = arith.constant 0 : index
    %333 = vector.load %arg9[%c0_76, %c0_77] : memref<2x32xf32, #tpu.memory_space<vmem>>, vector<2x32xf32>
    tpu.vector_store %arg9[%c0_76, %c0_77], %328 {strides = array<i32>} : memref<2x32xf32, #tpu.memory_space<vmem>>, vector<2x32xf32>,
    %c0_78 = arith.constant 0 : index
    %c0_79 = arith.constant 0 : index
    %334 = vector.load %arg7[%c0_78, %c0_79] : memref<2x32xf32, #tpu.memory_space<vmem>>, vector<2x32xf32>
    tpu.vector_store %arg7[%c0_78, %c0_79], %328 {strides = array<i32>} : memref<2x32xf32, #tpu.memory_space<vmem>>, vector<2x32xf32>,
    return
  }
  func.func @transform_0(%arg0: i32, %arg1: i32) -> (i32, i32) {
    %c0_i32 = arith.constant 0 : i32
    return %arg0, %arg1 : i32, i32
  }
  func.func @transform_1(%arg0: i32, %arg1: i32) -> (i32, i32) {
    %c0_i32 = arith.constant 0 : i32
    %c0_i32_0 = arith.constant 0 : i32
    %c0_i32_1 = arith.constant 0 : i32
    return %c0_i32, %c0_i32_0 : i32, i32
  }
  func.func @transform_2(%arg0: i32, %arg1: i32) -> (i32, i32) {
    %c0_i32 = arith.constant 0 : i32
    %c0_i32_0 = arith.constant 0 : i32
    return %arg0, %c0_i32 : i32, i32
  }
  func.func @transform_3(%arg0: i32, %arg1: i32) -> (i32, i32) {
    %c0_i32 = arith.constant 0 : i32
    %c0_i32_0 = arith.constant 0 : i32
    return %arg0, %c0_i32 : i32, i32
  }
  func.func @transform_4(%arg0: i32, %arg1: i32) -> (i32, i32) {
    %c0_i32 = arith.constant 0 : i32
    return %arg0, %arg1 : i32, i32
  }
  func.func @transform_5(%arg0: i32, %arg1: i32) -> (i32, i32) {
    %c0_i32 = arith.constant 0 : i32
    %c0_i32_0 = arith.constant 0 : i32
    return %arg0, %c0_i32 : i32, i32
  }
}

</mosaic_0001>

<llo_original>
// kernel: tpu_custom_call.1
$region0: #{tpu_custom_call.1}
  #allocation0 [shape = 'u32[]', space=smem, size = 0x4, offset = 0x4, fixed_abs, tag = 'smem constant byte address 0x4 - core index']
  #allocation1 [shape = 'u32[144,128]{1,0:T(1,128)}', space=vmem, size = 0x12000, scoped, tag = 'internal scratch']
  #allocation2 [shape = 'f32[2,32]{1,0:T(2,128)}', space=vmem, size = 0x400, scoped, tag = 'scratch operand']
  #allocation3 [shape = 'f32[2,32]{1,0:T(2,128)}', space=vmem, size = 0x400, scoped, tag = 'scratch operand']
  %s0 = inlined_call_operand.hbm [shape: f32[2,2048], index: 0, kind: input, shape index: {}]
  %s1 = inlined_call_operand.hbm [shape: f32[32,128], index: 1, kind: input, shape index: {}]
  %s2 = inlined_call_operand.vmem [shape: f32[2,32], index: 2, kind: input, shape index: {}]
  %s3 = inlined_call_operand.vmem [shape: f32[2,32], index: 3, kind: input, shape index: {}]
  %s4 = inlined_call_operand.hbm [shape: f32[2,512], index: 4, kind: output, shape index: {0}]
  %s5 = inlined_call_operand.hbm [shape: f32[2,32], index: 5, kind: output, shape index: {1}]
  %6 = xla_tuple %s4, %s5
  %s7 = sld [smem:[#allocation0]]
  $region46: #{tpu_custom_call.1} parent=0
    _
  %s9 = ssub.s32 1, %s7
  %s10 = scalar_select 0, %s9, %s7
  $region1: #{tpu_custom_call.1} parent=0
    #allocation4 [shape = 'u8[16384]{0}', space=vmem, size = 0x4000, scoped, tag = 'input window, operand 0, single buffered']
    #allocation5 [shape = 's32[1]{0}', space=sflag, size = 0x4, scoped, tag = 'scoped memory for tpu_custom_call.1']
    #allocation6 [shape = 's32[1]{0}', space=sflag, size = 0x4, scoped, tag = 'scoped memory for tpu_custom_call.1']
    #allocation7 [shape = 'u8[16384]{0}', space=vmem, size = 0x4000, scoped, tag = 'input window, operand 1, single buffered']
    #allocation8 [shape = 's32[1]{0}', space=sflag, size = 0x4, scoped, tag = 'scoped memory for tpu_custom_call.1']
    #allocation9 [shape = 'u8[4096]{0}', space=vmem, size = 0x1000, scoped, tag = 'output window, operand 0, single buffered']
    #allocation10 [shape = 'u8[1024]{0}', space=vmem, size = 0x400, scoped, tag = 'output window, operand 1, single buffered']
    #allocation11 [shape = 's32[1]{0}', space=sflag, size = 0x4, scoped, tag = 'scoped memory for tpu_custom_call.1']
    %11 = vsyncpa [#allocation5], 0
    %12 = vsyncpa [#allocation8], 0
    %13 = vsyncpa [#allocation6], 0
    %14 = vsyncpa [#allocation11], 0
    // Predicated region
    $region2: #{tpu_custom_call.1} parent=1 // pred_check
      _
    $region3: #{tpu_custom_call.1} parent=1 // pred_check_branch
      %16 = sbr.rel (0) target = $region5
    $region4: #{tpu_custom_call.1} parent=1 // pred_region
      %s18 = ssub.s32 512, 512
      %19 = vsyncadd [#allocation5], %s18
      %s21 = sshll.u32 [#allocation4], 4
      %s22 = int_to_ptr.vmem [resolvable:$true] %s21
      %24 = dma.hbm_to_vmem [thread:$0]  %s0, 512, %s22, [#allocation5]
    $region5: #{tpu_custom_call.1} parent=1 // pred_fallthru
      _
    // Predicated region
    $region6: #{tpu_custom_call.1} parent=1 // pred_check
      _
    $region7: #{tpu_custom_call.1} parent=1 // pred_check_branch
      %26 = sbr.rel (0) target = $region9
    $region8: #{tpu_custom_call.1} parent=1 // pred_region
      %s28 = ssub.s32 512, 512
      %29 = vsyncadd [#allocation8], %s28
      %s30 = sshll.u32 [#allocation7], 4
      %s31 = int_to_ptr.vmem [resolvable:$true] %s30
      %36 = dma.hbm_to_vmem [thread:$0]  %s1, 512, %s31, [#allocation8], 128, 128, 8
    $region9: #{tpu_custom_call.1} parent=1 // pred_fallthru
      _
    // Predicated region
    $region10: #{tpu_custom_call.1} parent=1 // pred_check
      _
    $region11: #{tpu_custom_call.1} parent=1 // pred_check_branch
      %38 = sbr.rel (0) target = $region13
    $region12: #{tpu_custom_call.1} parent=1 // pred_region
      _
    $region13: #{tpu_custom_call.1} parent=1 // pred_fallthru
      _
    // Predicated region
    $region14: #{tpu_custom_call.1} parent=1 // pred_check
      _
    $region15: #{tpu_custom_call.1} parent=1 // pred_check_branch
      %40 = sbr.rel (0) target = $region17
    $region16: #{tpu_custom_call.1} parent=1 // pred_region
      _
    $region17: #{tpu_custom_call.1} parent=1 // pred_fallthru
      _
    // Predicated region
    $region18: #{tpu_custom_call.1} parent=1 // pred_check
      _
    $region19: #{tpu_custom_call.1} parent=1 // pred_check_branch
      %42 = sbr.rel (0) target = $region21
    $region20: #{tpu_custom_call.1} parent=1 // pred_region
      %43 = dma.done [#allocation5], 512
    $region21: #{tpu_custom_call.1} parent=1 // pred_fallthru
      _
    // Predicated region
    $region22: #{tpu_custom_call.1} parent=1 // pred_check
      _
    $region23: #{tpu_custom_call.1} parent=1 // pred_check_branch
      %45 = sbr.rel (0) target = $region25
    $region24: #{tpu_custom_call.1} parent=1 // pred_region
      %46 = dma.done [#allocation8], 512
    $region25: #{tpu_custom_call.1} parent=1 // pred_fallthru
      _
    %p47 = scmp.eq.s32.totalorder 0, 0
    // Predicated region
    $region26: #{tpu_custom_call.1} parent=1 // pred_check
      %p48 = pneg %p47
    $region27: #{tpu_custom_call.1} parent=1 // pred_check_branch
      %50 = sbr.rel (%p48) target = $region29
    $region28: #{tpu_custom_call.1} parent=1 // pred_region
      %v51 = vld [vmem:[%s2] sm:$0x3]
      %vm52 = vcmask 254976
      %53 = vst.msk [vmem:[#allocation2] sm:$0x3] %vm52, %v51
      %v54 = vld [vmem:[%s3] sm:$0x3]
      %55 = vst.msk [vmem:[#allocation3] sm:$0x3] %vm52, %v54
    $region29: #{tpu_custom_call.1} parent=1 // pred_fallthru
      _
    %v56 = vld [vmem:[#allocation7] sm:$0xff]
    %v57 = vld [vmem:[#allocation7 + $0x8] sm:$0xff]
    %v58 = vld [vmem:[#allocation7 + $0x10] sm:$0xff]
    %v59 = vld [vmem:[#allocation7 + $0x18] sm:$0xff]
    %v60 = vld [vmem:[#allocation2] sm:$0x3]
    %v61 = vld [vmem:[#allocation3] sm:$0x3]
    %v62 = vlaneseq
    %v63 = vand.u32 %v62, 127
    %vm64 = vcmp.ge.s32.totalorder %v63, 64
    %vm65 = vcmp.lt.s32.totalorder %v63, 96
    %vm66 = vmand %vm64, %vm65
    %v67 = vld [vmem:[#allocation4] sm:$0x3]
    %vm68 = vcmask 261120
    %v70 = vsel %vm68, %v60, 0
    %72 = vmatprep.subr.mxu0 0.0
    %73 = vmatpush1.msra.mxu0 0.0
    %74 = vmatprep.subr.mxu0 0.0
    %75 = vmatpush1.msra.mxu0 0.0
    %76 = vmatprep.subr.mxu0 0.0
    %77 = vmatpush1.msra.mxu0 0.0
    %78 = vmatprep.subr.mxu0 0.0
    %79 = vmatpush1.msra.mxu0 0.0
    %80 = vmatprep.subr.mxu0 0.0
    %81 = vmatpush1.msra.mxu0 0.0
    %82 = vmatprep.subr.mxu0 0.0
    %83 = vmatpush1.msra.mxu0 0.0
    %84 = vmatprep.subr.mxu0 0.0
    %85 = vmatpush1.msra.mxu0 0.0
    %86 = vmatprep.subr.mxu0 0.0
    %87 = vmatpush1.msra.mxu0 0.0
    %88 = vmatprep.subr.mxu0 0.0
    %89 = vmatpush1.msra.mxu0 0.0
    %90 = vmatprep.subr.mxu0 0.0
    %91 = vmatpush1.msra.mxu0 0.0
    %92 = vmatprep.subr.mxu0 0.0
    %93 = vmatpush1.msra.mxu0 0.0
    %94 = vmatprep.subr.mxu0 0.0
    %95 = vmatpush1.msra.mxu0 0.0
    %96 = vmatprep.subr.mxu0 0.0
    %97 = vmatpush1.msra.mxu0 %v59
    %98 = vmatprep.subr.mxu0 0.0
    %99 = vmatpush1.msra.mxu0 %v58
    %100 = vmatprep.subr.mxu0 0.0
    %101 = vmatpush1.msra.mxu0 %v57
    %102 = vmatprep.subr.mxu0 0.0
    %103 = vmatpush1.msra.mxu0 %v56
    %104 = vmatprep.subr.mxu0 0.0
    %105 = vmatpush2.msra.mxu0 0.0
    %106 = vmatprep.subr.mxu0 0.0
    %107 = vmatpush2.msra.mxu0 0.0
    %108 = vmatprep.subr.mxu0 0.0
    %109 = vmatpush2.msra.mxu0 0.0
    %110 = vmatprep.subr.mxu0 0.0
    %111 = vmatpush2.msra.mxu0 0.0
    %112 = vmatprep.subr.mxu0 0.0
    %113 = vmatpush2.msra.mxu0 0.0
    %114 = vmatprep.subr.mxu0 0.0
    %115 = vmatpush2.msra.mxu0 0.0
    %116 = vmatprep.subr.mxu0 0.0
    %117 = vmatpush2.msra.mxu0 0.0
    %118 = vmatprep.subr.mxu0 0.0
    %119 = vmatpush2.msra.mxu0 0.0
    %120 = vmatprep.subr.mxu0 0.0
    %121 = vmatpush2.msra.mxu0 0.0
    %122 = vmatprep.subr.mxu0 0.0
    %123 = vmatpush2.msra.mxu0 0.0
    %124 = vmatprep.subr.mxu0 0.0
    %125 = vmatpush2.msra.mxu0 0.0
    %126 = vmatprep.subr.mxu0 0.0
    %127 = vmatpush2.msra.mxu0 0.0
    %128 = vmatprep.subr.mxu0 0.0
    %129 = vmatpush2.msra.mxu0 0.0
    %130 = vmatprep.subr.mxu0 0.0
    %131 = vmatpush2.msra.mxu0 0.0
    %132 = vmatprep.subr.mxu0 0.0
    %133 = vmatpush2.msra.mxu0 0.0
    %134 = vmatprep.subr.mxu0 0.0
    %135 = vmatpush2.msra.mxu0 0.0
    %136 = vmatprep.mubr.f32.mxu0 0.0
    %137 = vmatmul.mubr.f32.gmra.mxu0 %v70
    %v138 = vpop.f32.mrf.mxu0
    %v139 = vadd.f32 0.0, %v138
    %v140 = vpop.f32.mrf.mxu0
    %141 = vdwg.mxu0
    %v142 = vadd.f32 %v67, %v139
    %v143 = vtanh.pop %v142
    %v144 = vxor.u32 %v142, 2147483648
    %v145 = vmul.f32 %v144, 1.442695
    %v146 = vpow.pop %v145
    %v147 = vadd.f32 %v146, 1.0
    %v148 = vrcp.pop %v147
    %v149 = vmul.f32 1.0, %v148
    %v150 = vsel %vm66, %v143, %v149
    %152 = vrot.lane.b32.xlu0 %v61, 32
    %v153 = vpop.permute.xlu0 %152
    %v155 = vmul.f32 %v150, %v153
    %157 = vrot.lane.b32.xlu0 %v150, 64
    %v158 = vpop.permute.xlu0 %157
    %v160 = vmul.f32 %v150, %v158
    %162 = vrot.lane.b32.xlu0 %v160, 32
    %v163 = vpop.permute.xlu0 %162
    %v165 = vadd.f32 %v155, %v163
    %v166 = vtanh.pop %v165
    %168 = vrot.lane.b32.xlu0 %v166, 64
    %v169 = vpop.permute.xlu0 %168
    %v171 = vmul.f32 %v150, %v169
    %v174 = vunpack.c.l.s4 1983009808
    %v175 = vunpack.c.0.s8 %v174
    %v176 = vlaneseq
    %v177 = vshrl.u32 %v176, 7
    %v178 = vsub.s32 %v175, %v177
    %v179 = vrot.slane %v171, %v178
    %180 = vrot.lane.b32.xlu0 %v179, 32
    %v181 = vpop.permute.xlu0 %180
    %vm183 = vcmask 254976
    %184 = vst.msk [vmem:[#allocation9] sm:$0x3] %vm183, %v181
    %v185 = vld [vmem:[#allocation4 + $0x2] sm:$0x3]
    %186 = vrot.lane.b32.xlu0 %v171, 32
    %v187 = vpop.permute.xlu0 %186
    %v188 = vsel %vm68, %v187, 0
    %190 = vmatprep.subr.mxu0 0.0
    %191 = vmatpush1.msra.mxu0 0.0
    %192 = vmatprep.subr.mxu0 0.0
    %193 = vmatpush1.msra.mxu0 0.0
    %194 = vmatprep.subr.mxu0 0.0
    %195 = vmatpush1.msra.mxu0 0.0
    %196 = vmatprep.subr.mxu0 0.0
    %197 = vmatpush1.msra.mxu0 0.0
    %198 = vmatprep.subr.mxu0 0.0
    %199 = vmatpush1.msra.mxu0 0.0
    %200 = vmatprep.subr.mxu0 0.0
    %201 = vmatpush1.msra.mxu0 0.0
    %202 = vmatprep.subr.mxu0 0.0
    %203 = vmatpush1.msra.mxu0 0.0
    %204 = vmatprep.subr.mxu0 0.0
    %205 = vmatpush1.msra.mxu0 0.0
    %206 = vmatprep.subr.mxu0 0.0
    %207 = vmatpush1.msra.mxu0 0.0
    %208 = vmatprep.subr.mxu0 0.0
    %209 = vmatpush1.msra.mxu0 0.0
    %210 = vmatprep.subr.mxu0 0.0
    %211 = vmatpush1.msra.mxu0 0.0
    %212 = vmatprep.subr.mxu0 0.0
    %213 = vmatpush1.msra.mxu0 0.0
    %214 = vmatprep.subr.mxu0 0.0
    %215 = vmatpush1.msra.mxu0 %v59
    %216 = vmatprep.subr.mxu0 0.0
    %217 = vmatpush1.msra.mxu0 %v58
    %218 = vmatprep.subr.mxu0 0.0
    %219 = vmatpush1.msra.mxu0 %v57
    %220 = vmatprep.subr.mxu0 0.0
    %221 = vmatpush1.msra.mxu0 %v56
    %222 = vmatprep.subr.mxu0 0.0
    %223 = vmatpush2.msra.mxu0 0.0
    %224 = vmatprep.subr.mxu0 0.0
    %225 = vmatpush2.msra.mxu0 0.0
    %226 = vmatprep.subr.mxu0 0.0
    %227 = vmatpush2.msra.mxu0 0.0
    %228 = vmatprep.subr.mxu0 0.0
    %229 = vmatpush2.msra.mxu0 0.0
    %230 = vmatprep.subr.mxu0 0.0
    %231 = vmatpush2.msra.mxu0 0.0
    %232 = vmatprep.subr.mxu0 0.0
    %233 = vmatpush2.msra.mxu0 0.0
    %234 = vmatprep.subr.mxu0 0.0
    %235 = vmatpush2.msra.mxu0 0.0
    %236 = vmatprep.subr.mxu0 0.0
    %237 = vmatpush2.msra.mxu0 0.0
    %238 = vmatprep.subr.mxu0 0.0
    %239 = vmatpush2.msra.mxu0 0.0
    %240 = vmatprep.subr.mxu0 0.0
    %241 = vmatpush2.msra.mxu0 0.0
    %242 = vmatprep.subr.mxu0 0.0
    %243 = vmatpush2.msra.mxu0 0.0
    %244 = vmatprep.subr.mxu0 0.0
    %245 = vmatpush2.msra.mxu0 0.0
    %246 = vmatprep.subr.mxu0 0.0
    %247 = vmatpush2.msra.mxu0 0.0
    %248 = vmatprep.subr.mxu0 0.0
    %249 = vmatpush2.msra.mxu0 0.0
    %250 = vmatprep.subr.mxu0 0.0
    %251 = vmatpush2.msra.mxu0 0.0
    %252 = vmatprep.subr.mxu0 0.0
    %253 = vmatpush2.msra.mxu0 0.0
    %254 = vmatprep.mubr.f32.mxu0 0.0
    %255 = vmatmul.mubr.f32.gmra.mxu0 %v188
    %v256 = vpop.f32.mrf.mxu0
    %v257 = vadd.f32 0.0, %v256
    %v258 = vpop.f32.mrf.mxu0
    %259 = vdwg.mxu0
    %v260 = vadd.f32 %v185, %v257
    %v261 = vtanh.pop %v260
    %v262 = vxor.u32 %v260, 2147483648
    %v263 = vmul.f32 %v262, 1.442695
    %v264 = vpow.pop %v263
    %v265 = vadd.f32 %v264, 1.0
    %v266 = vrcp.pop %v265
    %v267 = vmul.f32 1.0, %v266
    %v268 = vsel %vm66, %v261, %v267
    %v269 = vmul.f32 %v268, %v165
    %271 = vrot.lane.b32.xlu0 %v268, 64
    %v272 = vpop.permute.xlu0 %271
    %v274 = vmul.f32 %v268, %v272
    %276 = vrot.lane.b32.xlu0 %v274, 32
    %v277 = vpop.permute.xlu0 %276
    %v279 = vadd.f32 %v269, %v277
    %v280 = vtanh.pop %v279
    %282 = vrot.lane.b32.xlu0 %v280, 64
    %v283 = vpop.permute.xlu0 %282
    %v285 = vmul.f32 %v268, %v283
    %v288 = vunpack.c.l.s4 1983009808
    %v289 = vunpack.c.0.s8 %v288
    %v290 = vlaneseq
    %v291 = vshrl.u32 %v290, 7
    %v292 = vsub.s32 %v289, %v291
    %v293 = vrot.slane %v285, %v292
    %294 = vrot.lane.b32.xlu0 %v293, 64
    %v295 = vpop.permute.xlu0 %294
    %vm297 = vcmask 517376
    %298 = vst.msk [vmem:[#allocation9] sm:$0x3] %vm297, %v295
    %v299 = vld [vmem:[#allocation4 + $0x4] sm:$0x3]
    %300 = vrot.lane.b32.xlu0 %v285, 32
    %v301 = vpop.permute.xlu0 %300
    %v302 = vsel %vm68, %v301, 0
    %304 = vmatprep.subr.mxu0 0.0
    %305 = vmatpush1.msra.mxu0 0.0
    %306 = vmatprep.subr.mxu0 0.0
    %307 = vmatpush1.msra.mxu0 0.0
    %308 = vmatprep.subr.mxu0 0.0
    %309 = vmatpush1.msra.mxu0 0.0
    %310 = vmatprep.subr.mxu0 0.0
    %311 = vmatpush1.msra.mxu0 0.0
    %312 = vmatprep.subr.mxu0 0.0
    %313 = vmatpush1.msra.mxu0 0.0
    %314 = vmatprep.subr.mxu0 0.0
    %315 = vmatpush1.msra.mxu0 0.0
    %316 = vmatprep.subr.mxu0 0.0
    %317 = vmatpush1.msra.mxu0 0.0
    %318 = vmatprep.subr.mxu0 0.0
    %319 = vmatpush1.msra.mxu0 0.0
    %320 = vmatprep.subr.mxu0 0.0
    %321 = vmatpush1.msra.mxu0 0.0
    %322 = vmatprep.subr.mxu0 0.0
    %323 = vmatpush1.msra.mxu0 0.0
    %324 = vmatprep.subr.mxu0 0.0
    %325 = vmatpush1.msra.mxu0 0.0
    %326 = vmatprep.subr.mxu0 0.0
    %327 = vmatpush1.msra.mxu0 0.0
    %328 = vmatprep.subr.mxu0 0.0
    %329 = vmatpush1.msra.mxu0 %v59
    %330 = vmatprep.subr.mxu0 0.0
    %331 = vmatpush1.msra.mxu0 %v58
    %332 = vmatprep.subr.mxu0 0.0
    %333 = vmatpush1.msra.mxu0 %v57
    %334 = vmatprep.subr.mxu0 0.0
    %335 = vmatpush1.msra.mxu0 %v56
    %336 = vmatprep.subr.mxu0 0.0
    %337 = vmatpush2.msra.mxu0 0.0
    %338 = vmatprep.subr.mxu0 0.0
    %339 = vmatpush2.msra.mxu0 0.0
    %340 = vmatprep.subr.mxu0 0.0
    %341 = vmatpush2.msra.mxu0 0.0
    %342 = vmatprep.subr.mxu0 0.0
    %343 = vmatpush2.msra.mxu0 0.0
    %344 = vmatprep.subr.mxu0 0.0
    %345 = vmatpush2.msra.mxu0 0.0
    %346 = vmatprep.subr.mxu0 0.0
    %347 = vmatpush2.msra.mxu0 0.0
    %348 = vmatprep.subr.mxu0 0.0
    %349 = vmatpush2.msra.mxu0 0.0
    %350 = vmatprep.subr.mxu0 0.0
    %351 = vmatpush2.msra.mxu0 0.0
    %352 = vmatprep.subr.mxu0 0.0
    %353 = vmatpush2.msra.mxu0 0.0
    %354 = vmatprep.subr.mxu0 0.0
    %355 = vmatpush2.msra.mxu0 0.0
    %356 = vmatprep.subr.mxu0 0.0
    %357 = vmatpush2.msra.mxu0 0.0
    %358 = vmatprep.subr.mxu0 0.0
    %359 = vmatpush2.msra.mxu0 0.0
    %360 = vmatprep.subr.mxu0 0.0
    %361 = vmatpush2.msra.mxu0 0.0
    %362 = vmatprep.subr.mxu0 0.0
    %363 = vmatpush2.msra.mxu0 0.0
    %364 = vmatprep.subr.mxu0 0.0
    %365 = vmatpush2.msra.mxu0 0.0
    %366 = vmatprep.subr.mxu0 0.0
    %367 = vmatpush2.msra.mxu0 0.0
    %368 = vmatprep.mubr.f32.mxu0 0.0
    %369 = vmatmul.mubr.f32.gmra.mxu0 %v302
    %v370 = vpop.f32.mrf.mxu0
    %v371 = vadd.f32 0.0, %v370
    %v372 = vpop.f32.mrf.mxu0
    %373 = vdwg.mxu0
    %v374 = vadd.f32 %v299, %v371
    %v375 = vtanh.pop %v374
    %v376 = vxor.u32 %v374, 2147483648
    %v377 = vmul.f32 %v376, 1.442695
    %v378 = vpow.pop %v377
    %v379 = vadd.f32 %v378, 1.0
    %v380 = vrcp.pop %v379
    %v381 = vmul.f32 1.0, %v380
    %v382 = vsel %vm66, %v375, %v381
    %v383 = vmul.f32 %v382, %v279
    %385 = vrot.lane.b32.xlu0 %v382, 64
    %v386 = vpop.permute.xlu0 %385
    %v388 = vmul.f32 %v382, %v386
    %390 = vrot.lane.b32.xlu0 %v388, 32
    %v391 = vpop.permute.xlu0 %390
    %v393 = vadd.f32 %v383, %v391
    %v394 = vtanh.pop %v393
    %396 = vrot.lane.b32.xlu0 %v394, 64
    %v397 = vpop.permute.xlu0 %396
    %v399 = vmul.f32 %v382, %v397
    %v402 = vunpack.c.l.s4 1983009808
    %v403 = vunpack.c.0.s8 %v402
    %v404 = vlaneseq
    %v405 = vshrl.u32 %v404, 7
    %v406 = vsub.s32 %v403, %v405
    %v407 = vrot.slane %v399, %v406
    %408 = vrot.lane.b32.xlu0 %v407, 96
    %v409 = vpop.permute.xlu0 %408
    %vm411 = vcmask 779776
    %412 = vst.msk [vmem:[#allocation9] sm:$0x3] %vm411, %v409
    %v413 = vld [vmem:[#allocation4 + $0x6] sm:$0x3]
    %414 = vrot.lane.b32.xlu0 %v399, 32
    %v415 = vpop.permute.xlu0 %414
    %v416 = vsel %vm68, %v415, 0
    %418 = vmatprep.subr.mxu0 0.0
    %419 = vmatpush1.msra.mxu0 0.0
    %420 = vmatprep.subr.mxu0 0.0
    %421 = vmatpush1.msra.mxu0 0.0
    %422 = vmatprep.subr.mxu0 0.0
    %423 = vmatpush1.msra.mxu0 0.0
    %424 = vmatprep.subr.mxu0 0.0
    %425 = vmatpush1.msra.mxu0 0.0
    %426 = vmatprep.subr.mxu0 0.0
    %427 = vmatpush1.msra.mxu0 0.0
    %428 = vmatprep.subr.mxu0 0.0
    %429 = vmatpush1.msra.mxu0 0.0
    %430 = vmatprep.subr.mxu0 0.0
    %431 = vmatpush1.msra.mxu0 0.0
    %432 = vmatprep.subr.mxu0 0.0
    %433 = vmatpush1.msra.mxu0 0.0
    %434 = vmatprep.subr.mxu0 0.0
    %435 = vmatpush1.msra.mxu0 0.0
    %436 = vmatprep.subr.mxu0 0.0
    %437 = vmatpush1.msra.mxu0 0.0
    %438 = vmatprep.subr.mxu0 0.0
    %439 = vmatpush1.msra.mxu0 0.0
    %440 = vmatprep.subr.mxu0 0.0
    %441 = vmatpush1.msra.mxu0 0.0
    %442 = vmatprep.subr.mxu0 0.0
    %443 = vmatpush1.msra.mxu0 %v59
    %444 = vmatprep.subr.mxu0 0.0
    %445 = vmatpush1.msra.mxu0 %v58
    %446 = vmatprep.subr.mxu0 0.0
    %447 = vmatpush1.msra.mxu0 %v57
    %448 = vmatprep.subr.mxu0 0.0
    %449 = vmatpush1.msra.mxu0 %v56
    %450 = vmatprep.subr.mxu0 0.0
    %451 = vmatpush2.msra.mxu0 0.0
    %452 = vmatprep.subr.mxu0 0.0
    %453 = vmatpush2.msra.mxu0 0.0
    %454 = vmatprep.subr.mxu0 0.0
    %455 = vmatpush2.msra.mxu0 0.0
    %456 = vmatprep.subr.mxu0 0.0
    %457 = vmatpush2.msra.mxu0 0.0
    %458 = vmatprep.subr.mxu0 0.0
    %459 = vmatpush2.msra.mxu0 0.0
    %460 = vmatprep.subr.mxu0 0.0
    %461 = vmatpush2.msra.mxu0 0.0
    %462 = vmatprep.subr.mxu0 0.0
    %463 = vmatpush2.msra.mxu0 0.0
    %464 = vmatprep.subr.mxu0 0.0
    %465 = vmatpush2.msra.mxu0 0.0
    %466 = vmatprep.subr.mxu0 0.0
    %467 = vmatpush2.msra.mxu0 0.0
    %468 = vmatprep.subr.mxu0 0.0
    %469 = vmatpush2.msra.mxu0 0.0
    %470 = vmatprep.subr.mxu0 0.0
    %471 = vmatpush2.msra.mxu0 0.0
    %472 = vmatprep.subr.mxu0 0.0
    %473 = vmatpush2.msra.mxu0 0.0
    %474 = vmatprep.subr.mxu0 0.0
    %475 = vmatpush2.msra.mxu0 0.0
    %476 = vmatprep.subr.mxu0 0.0
    %477 = vmatpush2.msra.mxu0 0.0
    %478 = vmatprep.subr.mxu0 0.0
    %479 = vmatpush2.msra.mxu0 0.0
    %480 = vmatprep.subr.mxu0 0.0
    %481 = vmatpush2.msra.mxu0 0.0
    %482 = vmatprep.mubr.f32.mxu0 0.0
    %483 = vmatmul.mubr.f32.gmra.mxu0 %v416
    %v484 = vpop.f32.mrf.mxu0
    %v485 = vadd.f32 0.0, %v484
    %v486 = vpop.f32.mrf.mxu0
    %487 = vdwg.mxu0
    %v488 = vadd.f32 %v413, %v485
    %v489 = vtanh.pop %v488
    %v490 = vxor.u32 %v488, 2147483648
    %v491 = vmul.f32 %v490, 1.442695
    %v492 = vpow.pop %v491
    %v493 = vadd.f32 %v492, 1.0
    %v494 = vrcp.pop %v493
    %v495 = vmul.f32 1.0, %v494
    %v496 = vsel %vm66, %v489, %v495
    %v497 = vmul.f32 %v496, %v393
    %499 = vrot.lane.b32.xlu0 %v496, 64
    %v500 = vpop.permute.xlu0 %499
    %v502 = vmul.f32 %v496, %v500
    %504 = vrot.lane.b32.xlu0 %v502, 32
    %v505 = vpop.permute.xlu0 %504
    %v507 = vadd.f32 %v497, %v505
    %v508 = vtanh.pop %v507
    %510 = vrot.lane.b32.xlu0 %v508, 64
    %v511 = vpop.permute.xlu0 %510
    %v513 = vmul.f32 %v496, %v511
    %vm514 = vcmask 1042176
    %515 = vst.msk [vmem:[#allocation9] sm:$0x3] %vm514, %v513
    %v516 = vld [vmem:[#allocation4 + $0x8] sm:$0x3]
    %518 = vrot.lane.b32.xlu0 %v513, 32
    %v519 = vpop.permute.xlu0 %518
    %v520 = vsel %vm68, %v519, 0
    %522 = vmatprep.subr.mxu0 0.0
    %523 = vmatpush1.msra.mxu0 0.0
    %524 = vmatprep.subr.mxu0 0.0
    %525 = vmatpush1.msra.mxu0 0.0
    %526 = vmatprep.subr.mxu0 0.0
    %527 = vmatpush1.msra.mxu0 0.0
    %528 = vmatprep.subr.mxu0 0.0
    %529 = vmatpush1.msra.mxu0 0.0
    %530 = vmatprep.subr.mxu0 0.0
    %531 = vmatpush1.msra.mxu0 0.0
    %532 = vmatprep.subr.mxu0 0.0
    %533 = vmatpush1.msra.mxu0 0.0
    %534 = vmatprep.subr.mxu0 0.0
    %535 = vmatpush1.msra.mxu0 0.0
    %536 = vmatprep.subr.mxu0 0.0
    %537 = vmatpush1.msra.mxu0 0.0
    %538 = vmatprep.subr.mxu0 0.0
    %539 = vmatpush1.msra.mxu0 0.0
    %540 = vmatprep.subr.mxu0 0.0
    %541 = vmatpush1.msra.mxu0 0.0
    %542 = vmatprep.subr.mxu0 0.0
    %543 = vmatpush1.msra.mxu0 0.0
    %544 = vmatprep.subr.mxu0 0.0
    %545 = vmatpush1.msra.mxu0 0.0
    %546 = vmatprep.subr.mxu0 0.0
    %547 = vmatpush1.msra.mxu0 %v59
    %548 = vmatprep.subr.mxu0 0.0
    %549 = vmatpush1.msra.mxu0 %v58
    %550 = vmatprep.subr.mxu0 0.0
    %551 = vmatpush1.msra.mxu0 %v57
    %552 = vmatprep.subr.mxu0 0.0
    %553 = vmatpush1.msra.mxu0 %v56
    %554 = vmatprep.subr.mxu0 0.0
    %555 = vmatpush2.msra.mxu0 0.0
    %556 = vmatprep.subr.mxu0 0.0
    %557 = vmatpush2.msra.mxu0 0.0
    %558 = vmatprep.subr.mxu0 0.0
    %559 = vmatpush2.msra.mxu0 0.0
    %560 = vmatprep.subr.mxu0 0.0
    %561 = vmatpush2.msra.mxu0 0.0
    %562 = vmatprep.subr.mxu0 0.0
    %563 = vmatpush2.msra.mxu0 0.0
    %564 = vmatprep.subr.mxu0 0.0
    %565 = vmatpush2.msra.mxu0 0.0
    %566 = vmatprep.subr.mxu0 0.0
    %567 = vmatpush2.msra.mxu0 0.0
    %568 = vmatprep.subr.mxu0 0.0
    %569 = vmatpush2.msra.mxu0 0.0
    %570 = vmatprep.subr.mxu0 0.0
    %571 = vmatpush2.msra.mxu0 0.0
    %572 = vmatprep.subr.mxu0 0.0
    %573 = vmatpush2.msra.mxu0 0.0
    %574 = vmatprep.subr.mxu0 0.0
    %575 = vmatpush2.msra.mxu0 0.0
    %576 = vmatprep.subr.mxu0 0.0
    %577 = vmatpush2.msra.mxu0 0.0
    %578 = vmatprep.subr.mxu0 0.0
    %579 = vmatpush2.msra.mxu0 0.0
    %580 = vmatprep.subr.mxu0 0.0
    %581 = vmatpush2.msra.mxu0 0.0
    %582 = vmatprep.subr.mxu0 0.0
    %583 = vmatpush2.msra.mxu0 0.0
    %584 = vmatprep.subr.mxu0 0.0
    %585 = vmatpush2.msra.mxu0 0.0
    %586 = vmatprep.mubr.f32.mxu0 0.0
    %587 = vmatmul.mubr.f32.gmra.mxu0 %v520
    %v588 = vpop.f32.mrf.mxu0
    %v589 = vadd.f32 0.0, %v588
    %v590 = vpop.f32.mrf.mxu0
    %591 = vdwg.mxu0
    %v592 = vadd.f32 %v516, %v589
    %v593 = vtanh.pop %v592
    %v594 = vxor.u32 %v592, 2147483648
    %v595 = vmul.f32 %v594, 1.442695
    %v596 = vpow.pop %v595
    %v597 = vadd.f32 %v596, 1.0
    %v598 = vrcp.pop %v597
    %v599 = vmul.f32 1.0, %v598
    %v600 = vsel %vm66, %v593, %v599
    %v601 = vmul.f32 %v600, %v507
    %603 = vrot.lane.b32.xlu0 %v600, 64
    %v604 = vpop.permute.xlu0 %603
    %v606 = vmul.f32 %v600, %v604
    %608 = vrot.lane.b32.xlu0 %v606, 32
    %v609 = vpop.permute.xlu0 %608
    %v611 = vadd.f32 %v601, %v609
    %v612 = vtanh.pop %v611
    %614 = vrot.lane.b32.xlu0 %v612, 64
    %v615 = vpop.permute.xlu0 %614
    %v617 = vmul.f32 %v600, %v615
    %v620 = vunpack.c.l.s4 1983009808
    %v621 = vunpack.c.0.s8 %v620
    %v622 = vlaneseq
    %v623 = vshrl.u32 %v622, 7
    %v624 = vsub.s32 %v621, %v623
    %v625 = vrot.slane %v617, %v624
    %626 = vrot.lane.b32.xlu0 %v625, 32
    %v627 = vpop.permute.xlu0 %626
    %629 = vst.msk [vmem:[#allocation9 + $0x2] sm:$0x3] %vm183, %v627
    %v630 = vld [vmem:[#allocation4 + $0xa] sm:$0x3]
    %631 = vrot.lane.b32.xlu0 %v617, 32
    %v632 = vpop.permute.xlu0 %631
    %v633 = vsel %vm68, %v632, 0
    %635 = vmatprep.subr.mxu0 0.0
    %636 = vmatpush1.msra.mxu0 0.0
    %637 = vmatprep.subr.mxu0 0.0
    %638 = vmatpush1.msra.mxu0 0.0
    %639 = vmatprep.subr.mxu0 0.0
    %640 = vmatpush1.msra.mxu0 0.0
    %641 = vmatprep.subr.mxu0 0.0
    %642 = vmatpush1.msra.mxu0 0.0
    %643 = vmatprep.subr.mxu0 0.0
    %644 = vmatpush1.msra.mxu0 0.0
    %645 = vmatprep.subr.mxu0 0.0
    %646 = vmatpush1.msra.mxu0 0.0
    %647 = vmatprep.subr.mxu0 0.0
    %648 = vmatpush1.msra.mxu0 0.0
    %649 = vmatprep.subr.mxu0 0.0
    %650 = vmatpush1.msra.mxu0 0.0
    %651 = vmatprep.subr.mxu0 0.0
    %652 = vmatpush1.msra.mxu0 0.0
    %653 = vmatprep.subr.mxu0 0.0
    %654 = vmatpush1.msra.mxu0 0.0
    %655 = vmatprep.subr.mxu0 0.0
    %656 = vmatpush1.msra.mxu0 0.0
    %657 = vmatprep.subr.mxu0 0.0
    %658 = vmatpush1.msra.mxu0 0.0
    %659 = vmatprep.subr.mxu0 0.0
    %660 = vmatpush1.msra.mxu0 %v59
    %661 = vmatprep.subr.mxu0 0.0
    %662 = vmatpush1.msra.mxu0 %v58
    %663 = vmatprep.subr.mxu0 0.0
    %664 = vmatpush1.msra.mxu0 %v57
    %665 = vmatprep.subr.mxu0 0.0
    %666 = vmatpush1.msra.mxu0 %v56
    %667 = vmatprep.subr.mxu0 0.0
    %668 = vmatpush2.msra.mxu0 0.0
    %669 = vmatprep.subr.mxu0 0.0
    %670 = vmatpush2.msra.mxu0 0.0
    %671 = vmatprep.subr.mxu0 0.0
    %672 = vmatpush2.msra.mxu0 0.0
    %673 = vmatprep.subr.mxu0 0.0
    %674 = vmatpush2.msra.mxu0 0.0
    %675 = vmatprep.subr.mxu0 0.0
    %676 = vmatpush2.msra.mxu0 0.0
    %677 = vmatprep.subr.mxu0 0.0
    %678 = vmatpush2.msra.mxu0 0.0
    %679 = vmatprep.subr.mxu0 0.0
    %680 = vmatpush2.msra.mxu0 0.0
    %681 = vmatprep.subr.mxu0 0.0
    %682 = vmatpush2.msra.mxu0 0.0
    %683 = vmatprep.subr.mxu0 0.0
    %684 = vmatpush2.msra.mxu0 0.0
    %685 = vmatprep.subr.mxu0 0.0
    %686 = vmatpush2.msra.mxu0 0.0
    %687 = vmatprep.subr.mxu0 0.0
    %688 = vmatpush2.msra.mxu0 0.0
    %689 = vmatprep.subr.mxu0 0.0
    %690 = vmatpush2.msra.mxu0 0.0
    %691 = vmatprep.subr.mxu0 0.0
    %692 = vmatpush2.msra.mxu0 0.0
    %693 = vmatprep.subr.mxu0 0.0
    %694 = vmatpush2.msra.mxu0 0.0
    %695 = vmatprep.subr.mxu0 0.0
    %696 = vmatpush2.msra.mxu0 0.0
    %697 = vmatprep.subr.mxu0 0.0
    %698 = vmatpush2.msra.mxu0 0.0
    %699 = vmatprep.mubr.f32.mxu0 0.0
    %700 = vmatmul.mubr.f32.gmra.mxu0 %v633
    %v701 = vpop.f32.mrf.mxu0
    %v702 = vadd.f32 0.0, %v701
    %v703 = vpop.f32.mrf.mxu0
    %704 = vdwg.mxu0
    %v705 = vadd.f32 %v630, %v702
    %v706 = vtanh.pop %v705
    %v707 = vxor.u32 %v705, 2147483648
    %v708 = vmul.f32 %v707, 1.442695
    %v709 = vpow.pop %v708
    %v710 = vadd.f32 %v709, 1.0
    %v711 = vrcp.pop %v710
    %v712 = vmul.f32 1.0, %v711
    %v713 = vsel %vm66, %v706, %v712
    %v714 = vmul.f32 %v713, %v611
    %716 = vrot.lane.b32.xlu0 %v713, 64
    %v717 = vpop.permute.xlu0 %716
    %v719 = vmul.f32 %v713, %v717
    %721 = vrot.lane.b32.xlu0 %v719, 32
    %v722 = vpop.permute.xlu0 %721
    %v724 = vadd.f32 %v714, %v722
    %v725 = vtanh.pop %v724
    %727 = vrot.lane.b32.xlu0 %v725, 64
    %v728 = vpop.permute.xlu0 %727
    %v730 = vmul.f32 %v713, %v728
    %v733 = vunpack.c.l.s4 1983009808
    %v734 = vunpack.c.0.s8 %v733
    %v735 = vlaneseq
    %v736 = vshrl.u32 %v735, 7
    %v737 = vsub.s32 %v734, %v736
    %v738 = vrot.slane %v730, %v737
    %739 = vrot.lane.b32.xlu0 %v738, 64
    %v740 = vpop.permute.xlu0 %739
    %742 = vst.msk [vmem:[#allocation9 + $0x2] sm:$0x3] %vm297, %v740
    %v743 = vld [vmem:[#allocation4 + $0xc] sm:$0x3]
    %744 = vrot.lane.b32.xlu0 %v730, 32
    %v745 = vpop.permute.xlu0 %744
    %v746 = vsel %vm68, %v745, 0
    %748 = vmatprep.subr.mxu0 0.0
    %749 = vmatpush1.msra.mxu0 0.0
    %750 = vmatprep.subr.mxu0 0.0
    %751 = vmatpush1.msra.mxu0 0.0
    %752 = vmatprep.subr.mxu0 0.0
    %753 = vmatpush1.msra.mxu0 0.0
    %754 = vmatprep.subr.mxu0 0.0
    %755 = vmatpush1.msra.mxu0 0.0
    %756 = vmatprep.subr.mxu0 0.0
    %757 = vmatpush1.msra.mxu0 0.0
    %758 = vmatprep.subr.mxu0 0.0
    %759 = vmatpush1.msra.mxu0 0.0
    %760 = vmatprep.subr.mxu0 0.0
    %761 = vmatpush1.msra.mxu0 0.0
    %762 = vmatprep.subr.mxu0 0.0
    %763 = vmatpush1.msra.mxu0 0.0
    %764 = vmatprep.subr.mxu0 0.0
    %765 = vmatpush1.msra.mxu0 0.0
    %766 = vmatprep.subr.mxu0 0.0
    %767 = vmatpush1.msra.mxu0 0.0
    %768 = vmatprep.subr.mxu0 0.0
    %769 = vmatpush1.msra.mxu0 0.0
    %770 = vmatprep.subr.mxu0 0.0
    %771 = vmatpush1.msra.mxu0 0.0
    %772 = vmatprep.subr.mxu0 0.0
    %773 = vmatpush1.msra.mxu0 %v59
    %774 = vmatprep.subr.mxu0 0.0
    %775 = vmatpush1.msra.mxu0 %v58
    %776 = vmatprep.subr.mxu0 0.0
    %777 = vmatpush1.msra.mxu0 %v57
    %778 = vmatprep.subr.mxu0 0.0
    %779 = vmatpush1.msra.mxu0 %v56
    %780 = vmatprep.subr.mxu0 0.0
    %781 = vmatpush2.msra.mxu0 0.0
    %782 = vmatprep.subr.mxu0 0.0
    %783 = vmatpush2.msra.mxu0 0.0
    %784 = vmatprep.subr.mxu0 0.0
    %785 = vmatpush2.msra.mxu0 0.0
    %786 = vmatprep.subr.mxu0 0.0
    %787 = vmatpush2.msra.mxu0 0.0
    %788 = vmatprep.subr.mxu0 0.0
    %789 = vmatpush2.msra.mxu0 0.0
    %790 = vmatprep.subr.mxu0 0.0
    %791 = vmatpush2.msra.mxu0 0.0
    %792 = vmatprep.subr.mxu0 0.0
    %793 = vmatpush2.msra.mxu0 0.0
    %794 = vmatprep.subr.mxu0 0.0
    %795 = vmatpush2.msra.mxu0 0.0
    %796 = vmatprep.subr.mxu0 0.0
    %797 = vmatpush2.msra.mxu0 0.0
    %798 = vmatprep.subr.mxu0 0.0
    %799 = vmatpush2.msra.mxu0 0.0
    %800 = vmatprep.subr.mxu0 0.0
    %801 = vmatpush2.msra.mxu0 0.0
    %802 = vmatprep.subr.mxu0 0.0
    %803 = vmatpush2.msra.mxu0 0.0
    %804 = vmatprep.subr.mxu0 0.0
    %805 = vmatpush2.msra.mxu0 0.0
    %806 = vmatprep.subr.mxu0 0.0
    %807 = vmatpush2.msra.mxu0 0.0
    %808 = vmatprep.subr.mxu0 0.0
    %809 = vmatpush2.msra.mxu0 0.0
    %810 = vmatprep.subr.mxu0 0.0
    %811 = vmatpush2.msra.mxu0 0.0
    %812 = vmatprep.mubr.f32.mxu0 0.0
    %813 = vmatmul.mubr.f32.gmra.mxu0 %v746
    %v814 = vpop.f32.mrf.mxu0
    %v815 = vadd.f32 0.0, %v814
    %v816 = vpop.f32.mrf.mxu0
    %817 = vdwg.mxu0
    %v818 = vadd.f32 %v743, %v815
    %v819 = vtanh.pop %v818
    %v820 = vxor.u32 %v818, 2147483648
    %v821 = vmul.f32 %v820, 1.442695
    %v822 = vpow.pop %v821
    %v823 = vadd.f32 %v822, 1.0
    %v824 = vrcp.pop %v823
    %v825 = vmul.f32 1.0, %v824
    %v826 = vsel %vm66, %v819, %v825
    %v827 = vmul.f32 %v826, %v724
    %829 = vrot.lane.b32.xlu0 %v826, 64
    %v830 = vpop.permute.xlu0 %829
    %v832 = vmul.f32 %v826, %v830
    %834 = vrot.lane.b32.xlu0 %v832, 32
    %v835 = vpop.permute.xlu0 %834
    %v837 = vadd.f32 %v827, %v835
    %v838 = vtanh.pop %v837
    %840 = vrot.lane.b32.xlu0 %v838, 64
    %v841 = vpop.permute.xlu0 %840
    %v843 = vmul.f32 %v826, %v841
    %v846 = vunpack.c.l.s4 1983009808
    %v847 = vunpack.c.0.s8 %v846
    %v848 = vlaneseq
    %v849 = vshrl.u32 %v848, 7
    %v850 = vsub.s32 %v847, %v849
    %v851 = vrot.slane %v843, %v850
    %852 = vrot.lane.b32.xlu0 %v851, 96
    %v853 = vpop.permute.xlu0 %852
    %855 = vst.msk [vmem:[#allocation9 + $0x2] sm:$0x3] %vm411, %v853
    %v856 = vld [vmem:[#allocation4 + $0xe] sm:$0x3]
    %857 = vrot.lane.b32.xlu0 %v843, 32
    %v858 = vpop.permute.xlu0 %857
    %v859 = vsel %vm68, %v858, 0
    %861 = vmatprep.subr.mxu0 0.0
    %862 = vmatpush1.msra.mxu0 0.0
    %863 = vmatprep.subr.mxu0 0.0
    %864 = vmatpush1.msra.mxu0 0.0
    %865 = vmatprep.subr.mxu0 0.0
    %866 = vmatpush1.msra.mxu0 0.0
    %867 = vmatprep.subr.mxu0 0.0
    %868 = vmatpush1.msra.mxu0 0.0
    %869 = vmatprep.subr.mxu0 0.0
    %870 = vmatpush1.msra.mxu0 0.0
    %871 = vmatprep.subr.mxu0 0.0
    %872 = vmatpush1.msra.mxu0 0.0
    %873 = vmatprep.subr.mxu0 0.0
    %874 = vmatpush1.msra.mxu0 0.0
    %875 = vmatprep.subr.mxu0 0.0
    %876 = vmatpush1.msra.mxu0 0.0
    %877 = vmatprep.subr.mxu0 0.0
    %878 = vmatpush1.msra.mxu0 0.0
    %879 = vmatprep.subr.mxu0 0.0
    %880 = vmatpush1.msra.mxu0 0.0
    %881 = vmatprep.subr.mxu0 0.0
    %882 = vmatpush1.msra.mxu0 0.0
    %883 = vmatprep.subr.mxu0 0.0
    %884 = vmatpush1.msra.mxu0 0.0
    %885 = vmatprep.subr.mxu0 0.0
    %886 = vmatpush1.msra.mxu0 %v59
    %887 = vmatprep.subr.mxu0 0.0
    %888 = vmatpush1.msra.mxu0 %v58
    %889 = vmatprep.subr.mxu0 0.0
    %890 = vmatpush1.msra.mxu0 %v57
    %891 = vmatprep.subr.mxu0 0.0
    %892 = vmatpush1.msra.mxu0 %v56
    %893 = vmatprep.subr.mxu0 0.0
    %894 = vmatpush2.msra.mxu0 0.0
    %895 = vmatprep.subr.mxu0 0.0
    %896 = vmatpush2.msra.mxu0 0.0
    %897 = vmatprep.subr.mxu0 0.0
    %898 = vmatpush2.msra.mxu0 0.0
    %899 = vmatprep.subr.mxu0 0.0
    %900 = vmatpush2.msra.mxu0 0.0
    %901 = vmatprep.subr.mxu0 0.0
    %902 = vmatpush2.msra.mxu0 0.0
    %903 = vmatprep.subr.mxu0 0.0
    %904 = vmatpush2.msra.mxu0 0.0
    %905 = vmatprep.subr.mxu0 0.0
    %906 = vmatpush2.msra.mxu0 0.0
    %907 = vmatprep.subr.mxu0 0.0
    %908 = vmatpush2.msra.mxu0 0.0
    %909 = vmatprep.subr.mxu0 0.0
    %910 = vmatpush2.msra.mxu0 0.0
    %911 = vmatprep.subr.mxu0 0.0
    %912 = vmatpush2.msra.mxu0 0.0
    %913 = vmatprep.subr.mxu0 0.0
    %914 = vmatpush2.msra.mxu0 0.0
    %915 = vmatprep.subr.mxu0 0.0
    %916 = vmatpush2.msra.mxu0 0.0
    %917 = vmatprep.subr.mxu0 0.0
    %918 = vmatpush2.msra.mxu0 0.0
    %919 = vmatprep.subr.mxu0 0.0
    %920 = vmatpush2.msra.mxu0 0.0
    %921 = vmatprep.subr.mxu0 0.0
    %922 = vmatpush2.msra.mxu0 0.0
    %923 = vmatprep.subr.mxu0 0.0
    %924 = vmatpush2.msra.mxu0 0.0
    %925 = vmatprep.mubr.f32.mxu0 0.0
    %926 = vmatmul.mubr.f32.gmra.mxu0 %v859
    %v927 = vpop.f32.mrf.mxu0
    %v928 = vadd.f32 0.0, %v927
    %v929 = vpop.f32.mrf.mxu0
    %930 = vdwg.mxu0
    %v931 = vadd.f32 %v856, %v928
    %v932 = vtanh.pop %v931
    %v933 = vxor.u32 %v931, 2147483648
    %v934 = vmul.f32 %v933, 1.442695
    %v935 = vpow.pop %v934
    %v936 = vadd.f32 %v935, 1.0
    %v937 = vrcp.pop %v936
    %v938 = vmul.f32 1.0, %v937
    %v939 = vsel %vm66, %v932, %v938
    %v940 = vmul.f32 %v939, %v837
    %942 = vrot.lane.b32.xlu0 %v939, 64
    %v943 = vpop.permute.xlu0 %942
    %v945 = vmul.f32 %v939, %v943
    %947 = vrot.lane.b32.xlu0 %v945, 32
    %v948 = vpop.permute.xlu0 %947
    %v950 = vadd.f32 %v940, %v948
    %v951 = vtanh.pop %v950
    %953 = vrot.lane.b32.xlu0 %v951, 64
    %v954 = vpop.permute.xlu0 %953
    %v956 = vmul.f32 %v939, %v954
    %957 = vst.msk [vmem:[#allocation9 + $0x2] sm:$0x3] %vm514, %v956
    %v958 = vld [vmem:[#allocation4 + $0x10] sm:$0x3]
    %960 = vrot.lane.b32.xlu0 %v956, 32
    %v961 = vpop.permute.xlu0 %960
    %v962 = vsel %vm68, %v961, 0
    %964 = vmatprep.subr.mxu0 0.0
    %965 = vmatpush1.msra.mxu0 0.0
    %966 = vmatprep.subr.mxu0 0.0
    %967 = vmatpush1.msra.mxu0 0.0
    %968 = vmatprep.subr.mxu0 0.0
    %969 = vmatpush1.msra.mxu0 0.0
    %970 = vmatprep.subr.mxu0 0.0
    %971 = vmatpush1.msra.mxu0 0.0
    %972 = vmatprep.subr.mxu0 0.0
    %973 = vmatpush1.msra.mxu0 0.0
    %974 = vmatprep.subr.mxu0 0.0
    %975 = vmatpush1.msra.mxu0 0.0
    %976 = vmatprep.subr.mxu0 0.0
    %977 = vmatpush1.msra.mxu0 0.0
    %978 = vmatprep.subr.mxu0 0.0
    %979 = vmatpush1.msra.mxu0 0.0
    %980 = vmatprep.subr.mxu0 0.0
    %981 = vmatpush1.msra.mxu0 0.0
    %982 = vmatprep.subr.mxu0 0.0
    %983 = vmatpush1.msra.mxu0 0.0
    %984 = vmatprep.subr.mxu0 0.0
    %985 = vmatpush1.msra.mxu0 0.0
    %986 = vmatprep.subr.mxu0 0.0
    %987 = vmatpush1.msra.mxu0 0.0
    %988 = vmatprep.subr.mxu0 0.0
    %989 = vmatpush1.msra.mxu0 %v59
    %990 = vmatprep.subr.mxu0 0.0
    %991 = vmatpush1.msra.mxu0 %v58
    %992 = vmatprep.subr.mxu0 0.0
    %993 = vmatpush1.msra.mxu0 %v57
    %994 = vmatprep.subr.mxu0 0.0
    %995 = vmatpush1.msra.mxu0 %v56
    %996 = vmatprep.subr.mxu0 0.0
    %997 = vmatpush2.msra.mxu0 0.0
    %998 = vmatprep.subr.mxu0 0.0
    %999 = vmatpush2.msra.mxu0 0.0
    %1000 = vmatprep.subr.mxu0 0.0
    %1001 = vmatpush2.msra.mxu0 0.0
    %1002 = vmatprep.subr.mxu0 0.0
    %1003 = vmatpush2.msra.mxu0 0.0
    %1004 = vmatprep.subr.mxu0 0.0
    %1005 = vmatpush2.msra.mxu0 0.0
    %1006 = vmatprep.subr.mxu0 0.0
    %1007 = vmatpush2.msra.mxu0 0.0
    %1008 = vmatprep.subr.mxu0 0.0
    %1009 = vmatpush2.msra.mxu0 0.0
    %1010 = vmatprep.subr.mxu0 0.0
    %1011 = vmatpush2.msra.mxu0 0.0
    %1012 = vmatprep.subr.mxu0 0.0
    %1013 = vmatpush2.msra.mxu0 0.0
    %1014 = vmatprep.subr.mxu0 0.0
    %1015 = vmatpush2.msra.mxu0 0.0
    %1016 = vmatprep.subr.mxu0 0.0
    %1017 = vmatpush2.msra.mxu0 0.0
    %1018 = vmatprep.subr.mxu0 0.0
    %1019 = vmatpush2.msra.mxu0 0.0
    %1020 = vmatprep.subr.mxu0 0.0
    %1021 = vmatpush2.msra.mxu0 0.0
    %1022 = vmatprep.subr.mxu0 0.0
    %1023 = vmatpush2.msra.mxu0 0.0
    %1024 = vmatprep.subr.mxu0 0.0
    %1025 = vmatpush2.msra.mxu0 0.0
    %1026 = vmatprep.subr.mxu0 0.0
    %1027 = vmatpush2.msra.mxu0 0.0
    %1028 = vmatprep.mubr.f32.mxu0 0.0
    %1029 = vmatmul.mubr.f32.gmra.mxu0 %v962
    %v1030 = vpop.f32.mrf.mxu0
    %v1031 = vadd.f32 0.0, %v1030
    %v1032 = vpop.f32.mrf.mxu0
    %1033 = vdwg.mxu0
    %v1034 = vadd.f32 %v958, %v1031
    %v1035 = vtanh.pop %v1034
    %v1036 = vxor.u32 %v1034, 2147483648
    %v1037 = vmul.f32 %v1036, 1.442695
    %v1038 = vpow.pop %v1037
    %v1039 = vadd.f32 %v1038, 1.0
    %v1040 = vrcp.pop %v1039
    %v1041 = vmul.f32 1.0, %v1040
    %v1042 = vsel %vm66, %v1035, %v1041
    %v1043 = vmul.f32 %v1042, %v950
    %1045 = vrot.lane.b32.xlu0 %v1042, 64
    %v1046 = vpop.permute.xlu0 %1045
    %v1048 = vmul.f32 %v1042, %v1046
    %1050 = vrot.lane.b32.xlu0 %v1048, 32
    %v1051 = vpop.permute.xlu0 %1050
    %v1053 = vadd.f32 %v1043, %v1051
    %v1054 = vtanh.pop %v1053
    %1056 = vrot.lane.b32.xlu0 %v1054, 64
    %v1057 = vpop.permute.xlu0 %1056
    %v1059 = vmul.f32 %v1042, %v1057
    %v1062 = vunpack.c.l.s4 1983009808
    %v1063 = vunpack.c.0.s8 %v1062
    %v1064 = vlaneseq
    %v1065 = vshrl.u32 %v1064, 7
    %v1066 = vsub.s32 %v1063, %v1065
    %v1067 = vrot.slane %v1059, %v1066
    %1068 = vrot.lane.b32.xlu0 %v1067, 32
    %v1069 = vpop.permute.xlu0 %1068
    %1071 = vst.msk [vmem:[#allocation9 + $0x4] sm:$0x3] %vm183, %v1069
    %v1072 = vld [vmem:[#allocation4 + $0x12] sm:$0x3]
    %1073 = vrot.lane.b32.xlu0 %v1059, 32
    %v1074 = vpop.permute.xlu0 %1073
    %v1075 = vsel %vm68, %v1074, 0
    %1077 = vmatprep.subr.mxu0 0.0
    %1078 = vmatpush1.msra.mxu0 0.0
    %1079 = vmatprep.subr.mxu0 0.0
    %1080 = vmatpush1.msra.mxu0 0.0
    %1081 = vmatprep.subr.mxu0 0.0
    %1082 = vmatpush1.msra.mxu0 0.0
    %1083 = vmatprep.subr.mxu0 0.0
    %1084 = vmatpush1.msra.mxu0 0.0
    %1085 = vmatprep.subr.mxu0 0.0
    %1086 = vmatpush1.msra.mxu0 0.0
    %1087 = vmatprep.subr.mxu0 0.0
    %1088 = vmatpush1.msra.mxu0 0.0
    %1089 = vmatprep.subr.mxu0 0.0
    %1090 = vmatpush1.msra.mxu0 0.0
    %1091 = vmatprep.subr.mxu0 0.0
    %1092 = vmatpush1.msra.mxu0 0.0
    %1093 = vmatprep.subr.mxu0 0.0
    %1094 = vmatpush1.msra.mxu0 0.0
    %1095 = vmatprep.subr.mxu0 0.0
    %1096 = vmatpush1.msra.mxu0 0.0
    %1097 = vmatprep.subr.mxu0 0.0
    %1098 = vmatpush1.msra.mxu0 0.0
    %1099 = vmatprep.subr.mxu0 0.0
    %1100 = vmatpush1.msra.mxu0 0.0
    %1101 = vmatprep.subr.mxu0 0.0
    %1102 = vmatpush1.msra.mxu0 %v59
    %1103 = vmatprep.subr.mxu0 0.0
    %1104 = vmatpush1.msra.mxu0 %v58
    %1105 = vmatprep.subr.mxu0 0.0
    %1106 = vmatpush1.msra.mxu0 %v57
    %1107 = vmatprep.subr.mxu0 0.0
    %1108 = vmatpush1.msra.mxu0 %v56
    %1109 = vmatprep.subr.mxu0 0.0
    %1110 = vmatpush2.msra.mxu0 0.0
    %1111 = vmatprep.subr.mxu0 0.0
    %1112 = vmatpush2.msra.mxu0 0.0
    %1113 = vmatprep.subr.mxu0 0.0
    %1114 = vmatpush2.msra.mxu0 0.0
    %1115 = vmatprep.subr.mxu0 0.0
    %1116 = vmatpush2.msra.mxu0 0.0
    %1117 = vmatprep.subr.mxu0 0.0
    %1118 = vmatpush2.msra.mxu0 0.0
    %1119 = vmatprep.subr.mxu0 0.0
    %1120 = vmatpush2.msra.mxu0 0.0
    %1121 = vmatprep.subr.mxu0 0.0
    %1122 = vmatpush2.msra.mxu0 0.0
    %1123 = vmatprep.subr.mxu0 0.0
    %1124 = vmatpush2.msra.mxu0 0.0
    %1125 = vmatprep.subr.mxu0 0.0
    %1126 = vmatpush2.msra.mxu0 0.0
    %1127 = vmatprep.subr.mxu0 0.0
    %1128 = vmatpush2.msra.mxu0 0.0
    %1129 = vmatprep.subr.mxu0 0.0
    %1130 = vmatpush2.msra.mxu0 0.0
    %1131 = vmatprep.subr.mxu0 0.0
    %1132 = vmatpush2.msra.mxu0 0.0
    %1133 = vmatprep.subr.mxu0 0.0
    %1134 = vmatpush2.msra.mxu0 0.0
    %1135 = vmatprep.subr.mxu0 0.0
    %1136 = vmatpush2.msra.mxu0 0.0
    %1137 = vmatprep.subr.mxu0 0.0
    %1138 = vmatpush2.msra.mxu0 0.0
    %1139 = vmatprep.subr.mxu0 0.0
    %1140 = vmatpush2.msra.mxu0 0.0
    %1141 = vmatprep.mubr.f32.mxu0 0.0
    %1142 = vmatmul.mubr.f32.gmra.mxu0 %v1075
    %v1143 = vpop.f32.mrf.mxu0
    %v1144 = vadd.f32 0.0, %v1143
    %v1145 = vpop.f32.mrf.mxu0
    %1146 = vdwg.mxu0
    %v1147 = vadd.f32 %v1072, %v1144
    %v1148 = vtanh.pop %v1147
    %v1149 = vxor.u32 %v1147, 2147483648
    %v1150 = vmul.f32 %v1149, 1.442695
    %v1151 = vpow.pop %v1150
    %v1152 = vadd.f32 %v1151, 1.0
    %v1153 = vrcp.pop %v1152
    %v1154 = vmul.f32 1.0, %v1153
    %v1155 = vsel %vm66, %v1148, %v1154
    %v1156 = vmul.f32 %v1155, %v1053
    %1158 = vrot.lane.b32.xlu0 %v1155, 64
    %v1159 = vpop.permute.xlu0 %1158
    %v1161 = vmul.f32 %v1155, %v1159
    %1163 = vrot.lane.b32.xlu0 %v1161, 32
    %v1164 = vpop.permute.xlu0 %1163
    %v1166 = vadd.f32 %v1156, %v1164
    %v1167 = vtanh.pop %v1166
    %1169 = vrot.lane.b32.xlu0 %v1167, 64
    %v1170 = vpop.permute.xlu0 %1169
    %v1172 = vmul.f32 %v1155, %v1170
    %v1175 = vunpack.c.l.s4 1983009808
    %v1176 = vunpack.c.0.s8 %v1175
    %v1177 = vlaneseq
    %v1178 = vshrl.u32 %v1177, 7
    %v1179 = vsub.s32 %v1176, %v1178
    %v1180 = vrot.slane %v1172, %v1179
    %1181 = vrot.lane.b32.xlu0 %v1180, 64
    %v1182 = vpop.permute.xlu0 %1181
    %1184 = vst.msk [vmem:[#allocation9 + $0x4] sm:$0x3] %vm297, %v1182
    %v1185 = vld [vmem:[#allocation4 + $0x14] sm:$0x3]
    %1186 = vrot.lane.b32.xlu0 %v1172, 32
    %v1187 = vpop.permute.xlu0 %1186
    %v1188 = vsel %vm68, %v1187, 0
    %1190 = vmatprep.subr.mxu0 0.0
    %1191 = vmatpush1.msra.mxu0 0.0
    %1192 = vmatprep.subr.mxu0 0.0
    %1193 = vmatpush1.msra.mxu0 0.0
    %1194 = vmatprep.subr.mxu0 0.0
    %1195 = vmatpush1.msra.mxu0 0.0
    %1196 = vmatprep.subr.mxu0 0.0
    %1197 = vmatpush1.msra.mxu0 0.0
    %1198 = vmatprep.subr.mxu0 0.0
    %1199 = vmatpush1.msra.mxu0 0.0
    %1200 = vmatprep.subr.mxu0 0.0
    %1201 = vmatpush1.msra.mxu0 0.0
    %1202 = vmatprep.subr.mxu0 0.0
    %1203 = vmatpush1.msra.mxu0 0.0
    %1204 = vmatprep.subr.mxu0 0.0
    %1205 = vmatpush1.msra.mxu0 0.0
    %1206 = vmatprep.subr.mxu0 0.0
    %1207 = vmatpush1.msra.mxu0 0.0
    %1208 = vmatprep.subr.mxu0 0.0
    %1209 = vmatpush1.msra.mxu0 0.0
    %1210 = vmatprep.subr.mxu0 0.0
    %1211 = vmatpush1.msra.mxu0 0.0
    %1212 = vmatprep.subr.mxu0 0.0
    %1213 = vmatpush1.msra.mxu0 0.0
    %1214 = vmatprep.subr.mxu0 0.0
    %1215 = vmatpush1.msra.mxu0 %v59
    %1216 = vmatprep.subr.mxu0 0.0
    %1217 = vmatpush1.msra.mxu0 %v58
    %1218 = vmatprep.subr.mxu0 0.0
    %1219 = vmatpush1.msra.mxu0 %v57
    %1220 = vmatprep.subr.mxu0 0.0
    %1221 = vmatpush1.msra.mxu0 %v56
    %1222 = vmatprep.subr.mxu0 0.0
    %1223 = vmatpush2.msra.mxu0 0.0
    %1224 = vmatprep.subr.mxu0 0.0
    %1225 = vmatpush2.msra.mxu0 0.0
    %1226 = vmatprep.subr.mxu0 0.0
    %1227 = vmatpush2.msra.mxu0 0.0
    %1228 = vmatprep.subr.mxu0 0.0
    %1229 = vmatpush2.msra.mxu0 0.0
    %1230 = vmatprep.subr.mxu0 0.0
    %1231 = vmatpush2.msra.mxu0 0.0
    %1232 = vmatprep.subr.mxu0 0.0
    %1233 = vmatpush2.msra.mxu0 0.0
    %1234 = vmatprep.subr.mxu0 0.0
    %1235 = vmatpush2.msra.mxu0 0.0
    %1236 = vmatprep.subr.mxu0 0.0
    %1237 = vmatpush2.msra.mxu0 0.0
    %1238 = vmatprep.subr.mxu0 0.0
    %1239 = vmatpush2.msra.mxu0 0.0
    %1240 = vmatprep.subr.mxu0 0.0
    %1241 = vmatpush2.msra.mxu0 0.0
    %1242 = vmatprep.subr.mxu0 0.0
    %1243 = vmatpush2.msra.mxu0 0.0
    %1244 = vmatprep.subr.mxu0 0.0
    %1245 = vmatpush2.msra.mxu0 0.0
    %1246 = vmatprep.subr.mxu0 0.0
    %1247 = vmatpush2.msra.mxu0 0.0
    %1248 = vmatprep.subr.mxu0 0.0
    %1249 = vmatpush2.msra.mxu0 0.0
    %1250 = vmatprep.subr.mxu0 0.0
    %1251 = vmatpush2.msra.mxu0 0.0
    %1252 = vmatprep.subr.mxu0 0.0
    %1253 = vmatpush2.msra.mxu0 0.0
    %1254 = vmatprep.mubr.f32.mxu0 0.0
    %1255 = vmatmul.mubr.f32.gmra.mxu0 %v1188
    %v1256 = vpop.f32.mrf.mxu0
    %v1257 = vadd.f32 0.0, %v1256
    %v1258 = vpop.f32.mrf.mxu0
    %1259 = vdwg.mxu0
    %v1260 = vadd.f32 %v1185, %v1257
    %v1261 = vtanh.pop %v1260
    %v1262 = vxor.u32 %v1260, 2147483648
    %v1263 = vmul.f32 %v1262, 1.442695
    %v1264 = vpow.pop %v1263
    %v1265 = vadd.f32 %v1264, 1.0
    %v1266 = vrcp.pop %v1265
    %v1267 = vmul.f32 1.0, %v1266
    %v1268 = vsel %vm66, %v1261, %v1267
    %v1269 = vmul.f32 %v1268, %v1166
    %1271 = vrot.lane.b32.xlu0 %v1268, 64
    %v1272 = vpop.permute.xlu0 %1271
    %v1274 = vmul.f32 %v1268, %v1272
    %1276 = vrot.lane.b32.xlu0 %v1274, 32
    %v1277 = vpop.permute.xlu0 %1276
    %v1279 = vadd.f32 %v1269, %v1277
    %v1280 = vtanh.pop %v1279
    %1282 = vrot.lane.b32.xlu0 %v1280, 64
    %v1283 = vpop.permute.xlu0 %1282
    %v1285 = vmul.f32 %v1268, %v1283
    %v1288 = vunpack.c.l.s4 1983009808
    %v1289 = vunpack.c.0.s8 %v1288
    %v1290 = vlaneseq
    %v1291 = vshrl.u32 %v1290, 7
    %v1292 = vsub.s32 %v1289, %v1291
    %v1293 = vrot.slane %v1285, %v1292
    %1294 = vrot.lane.b32.xlu0 %v1293, 96
    %v1295 = vpop.permute.xlu0 %1294
    %1297 = vst.msk [vmem:[#allocation9 + $0x4] sm:$0x3] %vm411, %v1295
    %v1298 = vld [vmem:[#allocation4 + $0x16] sm:$0x3]
    %1299 = vrot.lane.b32.xlu0 %v1285, 32
    %v1300 = vpop.permute.xlu0 %1299
    %v1301 = vsel %vm68, %v1300, 0
    %1303 = vmatprep.subr.mxu0 0.0
    %1304 = vmatpush1.msra.mxu0 0.0
    %1305 = vmatprep.subr.mxu0 0.0
    %1306 = vmatpush1.msra.mxu0 0.0
    %1307 = vmatprep.subr.mxu0 0.0
    %1308 = vmatpush1.msra.mxu0 0.0
    %1309 = vmatprep.subr.mxu0 0.0
    %1310 = vmatpush1.msra.mxu0 0.0
    %1311 = vmatprep.subr.mxu0 0.0
    %1312 = vmatpush1.msra.mxu0 0.0
    %1313 = vmatprep.subr.mxu0 0.0
    %1314 = vmatpush1.msra.mxu0 0.0
    %1315 = vmatprep.subr.mxu0 0.0
    %1316 = vmatpush1.msra.mxu0 0.0
    %1317 = vmatprep.subr.mxu0 0.0
    %1318 = vmatpush1.msra.mxu0 0.0
    %1319 = vmatprep.subr.mxu0 0.0
    %1320 = vmatpush1.msra.mxu0 0.0
    %1321 = vmatprep.subr.mxu0 0.0
    %1322 = vmatpush1.msra.mxu0 0.0
    %1323 = vmatprep.subr.mxu0 0.0
    %1324 = vmatpush1.msra.mxu0 0.0
    %1325 = vmatprep.subr.mxu0 0.0
    %1326 = vmatpush1.msra.mxu0 0.0
    %1327 = vmatprep.subr.mxu0 0.0
    %1328 = vmatpush1.msra.mxu0 %v59
    %1329 = vmatprep.subr.mxu0 0.0
    %1330 = vmatpush1.msra.mxu0 %v58
    %1331 = vmatprep.subr.mxu0 0.0
    %1332 = vmatpush1.msra.mxu0 %v57
    %1333 = vmatprep.subr.mxu0 0.0
    %1334 = vmatpush1.msra.mxu0 %v56
    %1335 = vmatprep.subr.mxu0 0.0
    %1336 = vmatpush2.msra.mxu0 0.0
    %1337 = vmatprep.subr.mxu0 0.0
    %1338 = vmatpush2.msra.mxu0 0.0
    %1339 = vmatprep.subr.mxu0 0.0
    %1340 = vmatpush2.msra.mxu0 0.0
    %1341 = vmatprep.subr.mxu0 0.0
    %1342 = vmatpush2.msra.mxu0 0.0
    %1343 = vmatprep.subr.mxu0 0.0
    %1344 = vmatpush2.msra.mxu0 0.0
    %1345 = vmatprep.subr.mxu0 0.0
    %1346 = vmatpush2.msra.mxu0 0.0
    %1347 = vmatprep.subr.mxu0 0.0
    %1348 = vmatpush2.msra.mxu0 0.0
    %1349 = vmatprep.subr.mxu0 0.0
    %1350 = vmatpush2.msra.mxu0 0.0
    %1351 = vmatprep.subr.mxu0 0.0
    %1352 = vmatpush2.msra.mxu0 0.0
    %1353 = vmatprep.subr.mxu0 0.0
    %1354 = vmatpush2.msra.mxu0 0.0
    %1355 = vmatprep.subr.mxu0 0.0
    %1356 = vmatpush2.msra.mxu0 0.0
    %1357 = vmatprep.subr.mxu0 0.0
    %1358 = vmatpush2.msra.mxu0 0.0
    %1359 = vmatprep.subr.mxu0 0.0
    %1360 = vmatpush2.msra.mxu0 0.0
    %1361 = vmatprep.subr.mxu0 0.0
    %1362 = vmatpush2.msra.mxu0 0.0
    %1363 = vmatprep.subr.mxu0 0.0
    %1364 = vmatpush2.msra.mxu0 0.0
    %1365 = vmatprep.subr.mxu0 0.0
    %1366 = vmatpush2.msra.mxu0 0.0
    %1367 = vmatprep.mubr.f32.mxu0 0.0
    %1368 = vmatmul.mubr.f32.gmra.mxu0 %v1301
    %v1369 = vpop.f32.mrf.mxu0
    %v1370 = vadd.f32 0.0, %v1369
    %v1371 = vpop.f32.mrf.mxu0
    %1372 = vdwg.mxu0
    %v1373 = vadd.f32 %v1298, %v1370
    %v1374 = vtanh.pop %v1373
    %v1375 = vxor.u32 %v1373, 2147483648
    %v1376 = vmul.f32 %v1375, 1.442695
    %v1377 = vpow.pop %v1376
    %v1378 = vadd.f32 %v1377, 1.0
    %v1379 = vrcp.pop %v1378
    %v1380 = vmul.f32 1.0, %v1379
    %v1381 = vsel %vm66, %v1374, %v1380
    %v1382 = vmul.f32 %v1381, %v1279
    %1384 = vrot.lane.b32.xlu0 %v1381, 64
    %v1385 = vpop.permute.xlu0 %1384
    %v1387 = vmul.f32 %v1381, %v1385
    %1389 = vrot.lane.b32.xlu0 %v1387, 32
    %v1390 = vpop.permute.xlu0 %1389
    %v1392 = vadd.f32 %v1382, %v1390
    %v1393 = vtanh.pop %v1392
    %1395 = vrot.lane.b32.xlu0 %v1393, 64
    %v1396 = vpop.permute.xlu0 %1395
    %v1398 = vmul.f32 %v1381, %v1396
    %1399 = vst.msk [vmem:[#allocation9 + $0x4] sm:$0x3] %vm514, %v1398
    %v1400 = vld [vmem:[#allocation4 + $0x18] sm:$0x3]
    %1402 = vrot.lane.b32.xlu0 %v1398, 32
    %v1403 = vpop.permute.xlu0 %1402
    %v1404 = vsel %vm68, %v1403, 0
    %1406 = vmatprep.subr.mxu0 0.0
    %1407 = vmatpush1.msra.mxu0 0.0
    %1408 = vmatprep.subr.mxu0 0.0
    %1409 = vmatpush1.msra.mxu0 0.0
    %1410 = vmatprep.subr.mxu0 0.0
    %1411 = vmatpush1.msra.mxu0 0.0
    %1412 = vmatprep.subr.mxu0 0.0
    %1413 = vmatpush1.msra.mxu0 0.0
    %1414 = vmatprep.subr.mxu0 0.0
    %1415 = vmatpush1.msra.mxu0 0.0
    %1416 = vmatprep.subr.mxu0 0.0
    %1417 = vmatpush1.msra.mxu0 0.0
    %1418 = vmatprep.subr.mxu0 0.0
    %1419 = vmatpush1.msra.mxu0 0.0
    %1420 = vmatprep.subr.mxu0 0.0
    %1421 = vmatpush1.msra.mxu0 0.0
    %1422 = vmatprep.subr.mxu0 0.0
    %1423 = vmatpush1.msra.mxu0 0.0
    %1424 = vmatprep.subr.mxu0 0.0
    %1425 = vmatpush1.msra.mxu0 0.0
    %1426 = vmatprep.subr.mxu0 0.0
    %1427 = vmatpush1.msra.mxu0 0.0
    %1428 = vmatprep.subr.mxu0 0.0
    %1429 = vmatpush1.msra.mxu0 0.0
    %1430 = vmatprep.subr.mxu0 0.0
    %1431 = vmatpush1.msra.mxu0 %v59
    %1432 = vmatprep.subr.mxu0 0.0
    %1433 = vmatpush1.msra.mxu0 %v58
    %1434 = vmatprep.subr.mxu0 0.0
    %1435 = vmatpush1.msra.mxu0 %v57
    %1436 = vmatprep.subr.mxu0 0.0
    %1437 = vmatpush1.msra.mxu0 %v56
    %1438 = vmatprep.subr.mxu0 0.0
    %1439 = vmatpush2.msra.mxu0 0.0
    %1440 = vmatprep.subr.mxu0 0.0
    %1441 = vmatpush2.msra.mxu0 0.0
    %1442 = vmatprep.subr.mxu0 0.0
    %1443 = vmatpush2.msra.mxu0 0.0
    %1444 = vmatprep.subr.mxu0 0.0
    %1445 = vmatpush2.msra.mxu0 0.0
    %1446 = vmatprep.subr.mxu0 0.0
    %1447 = vmatpush2.msra.mxu0 0.0
    %1448 = vmatprep.subr.mxu0 0.0
    %1449 = vmatpush2.msra.mxu0 0.0
    %1450 = vmatprep.subr.mxu0 0.0
    %1451 = vmatpush2.msra.mxu0 0.0
    %1452 = vmatprep.subr.mxu0 0.0
    %1453 = vmatpush2.msra.mxu0 0.0
    %1454 = vmatprep.subr.mxu0 0.0
    %1455 = vmatpush2.msra.mxu0 0.0
    %1456 = vmatprep.subr.mxu0 0.0
    %1457 = vmatpush2.msra.mxu0 0.0
    %1458 = vmatprep.subr.mxu0 0.0
    %1459 = vmatpush2.msra.mxu0 0.0
    %1460 = vmatprep.subr.mxu0 0.0
    %1461 = vmatpush2.msra.mxu0 0.0
    %1462 = vmatprep.subr.mxu0 0.0
    %1463 = vmatpush2.msra.mxu0 0.0
    %1464 = vmatprep.subr.mxu0 0.0
    %1465 = vmatpush2.msra.mxu0 0.0
    %1466 = vmatprep.subr.mxu0 0.0
    %1467 = vmatpush2.msra.mxu0 0.0
    %1468 = vmatprep.subr.mxu0 0.0
    %1469 = vmatpush2.msra.mxu0 0.0
    %1470 = vmatprep.mubr.f32.mxu0 0.0
    %1471 = vmatmul.mubr.f32.gmra.mxu0 %v1404
    %v1472 = vpop.f32.mrf.mxu0
    %v1473 = vadd.f32 0.0, %v1472
    %v1474 = vpop.f32.mrf.mxu0
    %1475 = vdwg.mxu0
    %v1476 = vadd.f32 %v1400, %v1473
    %v1477 = vtanh.pop %v1476
    %v1478 = vxor.u32 %v1476, 2147483648
    %v1479 = vmul.f32 %v1478, 1.442695
    %v1480 = vpow.pop %v1479
    %v1481 = vadd.f32 %v1480, 1.0
    %v1482 = vrcp.pop %v1481
    %v1483 = vmul.f32 1.0, %v1482
    %v1484 = vsel %vm66, %v1477, %v1483
    %v1485 = vmul.f32 %v1484, %v1392
    %1487 = vrot.lane.b32.xlu0 %v1484, 64
    %v1488 = vpop.permute.xlu0 %1487
    %v1490 = vmul.f32 %v1484, %v1488
    %1492 = vrot.lane.b32.xlu0 %v1490, 32
    %v1493 = vpop.permute.xlu0 %1492
    %v1495 = vadd.f32 %v1485, %v1493
    %v1496 = vtanh.pop %v1495
    %1498 = vrot.lane.b32.xlu0 %v1496, 64
    %v1499 = vpop.permute.xlu0 %1498
    %v1501 = vmul.f32 %v1484, %v1499
    %v1504 = vunpack.c.l.s4 1983009808
    %v1505 = vunpack.c.0.s8 %v1504
    %v1506 = vlaneseq
    %v1507 = vshrl.u32 %v1506, 7
    %v1508 = vsub.s32 %v1505, %v1507
    %v1509 = vrot.slane %v1501, %v1508
    %1510 = vrot.lane.b32.xlu0 %v1509, 32
    %v1511 = vpop.permute.xlu0 %1510
    %1513 = vst.msk [vmem:[#allocation9 + $0x6] sm:$0x3] %vm183, %v1511
    %v1514 = vld [vmem:[#allocation4 + $0x1a] sm:$0x3]
    %1515 = vrot.lane.b32.xlu0 %v1501, 32
    %v1516 = vpop.permute.xlu0 %1515
    %v1517 = vsel %vm68, %v1516, 0
    %1519 = vmatprep.subr.mxu0 0.0
    %1520 = vmatpush1.msra.mxu0 0.0
    %1521 = vmatprep.subr.mxu0 0.0
    %1522 = vmatpush1.msra.mxu0 0.0
    %1523 = vmatprep.subr.mxu0 0.0
    %1524 = vmatpush1.msra.mxu0 0.0
    %1525 = vmatprep.subr.mxu0 0.0
    %1526 = vmatpush1.msra.mxu0 0.0
    %1527 = vmatprep.subr.mxu0 0.0
    %1528 = vmatpush1.msra.mxu0 0.0
    %1529 = vmatprep.subr.mxu0 0.0
    %1530 = vmatpush1.msra.mxu0 0.0
    %1531 = vmatprep.subr.mxu0 0.0
    %1532 = vmatpush1.msra.mxu0 0.0
    %1533 = vmatprep.subr.mxu0 0.0
    %1534 = vmatpush1.msra.mxu0 0.0
    %1535 = vmatprep.subr.mxu0 0.0
    %1536 = vmatpush1.msra.mxu0 0.0
    %1537 = vmatprep.subr.mxu0 0.0
    %1538 = vmatpush1.msra.mxu0 0.0
    %1539 = vmatprep.subr.mxu0 0.0
    %1540 = vmatpush1.msra.mxu0 0.0
    %1541 = vmatprep.subr.mxu0 0.0
    %1542 = vmatpush1.msra.mxu0 0.0
    %1543 = vmatprep.subr.mxu0 0.0
    %1544 = vmatpush1.msra.mxu0 %v59
    %1545 = vmatprep.subr.mxu0 0.0
    %1546 = vmatpush1.msra.mxu0 %v58
    %1547 = vmatprep.subr.mxu0 0.0
    %1548 = vmatpush1.msra.mxu0 %v57
    %1549 = vmatprep.subr.mxu0 0.0
    %1550 = vmatpush1.msra.mxu0 %v56
    %1551 = vmatprep.subr.mxu0 0.0
    %1552 = vmatpush2.msra.mxu0 0.0
    %1553 = vmatprep.subr.mxu0 0.0
    %1554 = vmatpush2.msra.mxu0 0.0
    %1555 = vmatprep.subr.mxu0 0.0
    %1556 = vmatpush2.msra.mxu0 0.0
    %1557 = vmatprep.subr.mxu0 0.0
    %1558 = vmatpush2.msra.mxu0 0.0
    %1559 = vmatprep.subr.mxu0 0.0
    %1560 = vmatpush2.msra.mxu0 0.0
    %1561 = vmatprep.subr.mxu0 0.0
    %1562 = vmatpush2.msra.mxu0 0.0
    %1563 = vmatprep.subr.mxu0 0.0
    %1564 = vmatpush2.msra.mxu0 0.0
    %1565 = vmatprep.subr.mxu0 0.0
    %1566 = vmatpush2.msra.mxu0 0.0
    %1567 = vmatprep.subr.mxu0 0.0
    %1568 = vmatpush2.msra.mxu0 0.0
    %1569 = vmatprep.subr.mxu0 0.0
    %1570 = vmatpush2.msra.mxu0 0.0
    %1571 = vmatprep.subr.mxu0 0.0
    %1572 = vmatpush2.msra.mxu0 0.0
    %1573 = vmatprep.subr.mxu0 0.0
    %1574 = vmatpush2.msra.mxu0 0.0
    %1575 = vmatprep.subr.mxu0 0.0
    %1576 = vmatpush2.msra.mxu0 0.0
    %1577 = vmatprep.subr.mxu0 0.0
    %1578 = vmatpush2.msra.mxu0 0.0
    %1579 = vmatprep.subr.mxu0 0.0
    %1580 = vmatpush2.msra.mxu0 0.0
    %1581 = vmatprep.subr.mxu0 0.0
    %1582 = vmatpush2.msra.mxu0 0.0
    %1583 = vmatprep.mubr.f32.mxu0 0.0
    %1584 = vmatmul.mubr.f32.gmra.mxu0 %v1517
    %v1585 = vpop.f32.mrf.mxu0
    %v1586 = vadd.f32 0.0, %v1585
    %v1587 = vpop.f32.mrf.mxu0
    %1588 = vdwg.mxu0
    %v1589 = vadd.f32 %v1514, %v1586
    %v1590 = vtanh.pop %v1589
    %v1591 = vxor.u32 %v1589, 2147483648
    %v1592 = vmul.f32 %v1591, 1.442695
    %v1593 = vpow.pop %v1592
    %v1594 = vadd.f32 %v1593, 1.0
    %v1595 = vrcp.pop %v1594
    %v1596 = vmul.f32 1.0, %v1595
    %v1597 = vsel %vm66, %v1590, %v1596
    %v1598 = vmul.f32 %v1597, %v1495
    %1600 = vrot.lane.b32.xlu0 %v1597, 64
    %v1601 = vpop.permute.xlu0 %1600
    %v1603 = vmul.f32 %v1597, %v1601
    %1605 = vrot.lane.b32.xlu0 %v1603, 32
    %v1606 = vpop.permute.xlu0 %1605
    %v1608 = vadd.f32 %v1598, %v1606
    %v1609 = vtanh.pop %v1608
    %1611 = vrot.lane.b32.xlu0 %v1609, 64
    %v1612 = vpop.permute.xlu0 %1611
    %v1614 = vmul.f32 %v1597, %v1612
    %v1617 = vunpack.c.l.s4 1983009808
    %v1618 = vunpack.c.0.s8 %v1617
    %v1619 = vlaneseq
    %v1620 = vshrl.u32 %v1619, 7
    %v1621 = vsub.s32 %v1618, %v1620
    %v1622 = vrot.slane %v1614, %v1621
    %1623 = vrot.lane.b32.xlu0 %v1622, 64
    %v1624 = vpop.permute.xlu0 %1623
    %1626 = vst.msk [vmem:[#allocation9 + $0x6] sm:$0x3] %vm297, %v1624
    %v1627 = vld [vmem:[#allocation4 + $0x1c] sm:$0x3]
    %1628 = vrot.lane.b32.xlu0 %v1614, 32
    %v1629 = vpop.permute.xlu0 %1628
    %v1630 = vsel %vm68, %v1629, 0
    %1632 = vmatprep.subr.mxu0 0.0
    %1633 = vmatpush1.msra.mxu0 0.0
    %1634 = vmatprep.subr.mxu0 0.0
    %1635 = vmatpush1.msra.mxu0 0.0
    %1636 = vmatprep.subr.mxu0 0.0
    %1637 = vmatpush1.msra.mxu0 0.0
    %1638 = vmatprep.subr.mxu0 0.0
    %1639 = vmatpush1.msra.mxu0 0.0
    %1640 = vmatprep.subr.mxu0 0.0
    %1641 = vmatpush1.msra.mxu0 0.0
    %1642 = vmatprep.subr.mxu0 0.0
    %1643 = vmatpush1.msra.mxu0 0.0
    %1644 = vmatprep.subr.mxu0 0.0
    %1645 = vmatpush1.msra.mxu0 0.0
    %1646 = vmatprep.subr.mxu0 0.0
    %1647 = vmatpush1.msra.mxu0 0.0
    %1648 = vmatprep.subr.mxu0 0.0
    %1649 = vmatpush1.msra.mxu0 0.0
    %1650 = vmatprep.subr.mxu0 0.0
    %1651 = vmatpush1.msra.mxu0 0.0
    %1652 = vmatprep.subr.mxu0 0.0
    %1653 = vmatpush1.msra.mxu0 0.0
    %1654 = vmatprep.subr.mxu0 0.0
    %1655 = vmatpush1.msra.mxu0 0.0
    %1656 = vmatprep.subr.mxu0 0.0
    %1657 = vmatpush1.msra.mxu0 %v59
    %1658 = vmatprep.subr.mxu0 0.0
    %1659 = vmatpush1.msra.mxu0 %v58
    %1660 = vmatprep.subr.mxu0 0.0
    %1661 = vmatpush1.msra.mxu0 %v57
    %1662 = vmatprep.subr.mxu0 0.0
    %1663 = vmatpush1.msra.mxu0 %v56
    %1664 = vmatprep.subr.mxu0 0.0
    %1665 = vmatpush2.msra.mxu0 0.0
    %1666 = vmatprep.subr.mxu0 0.0
    %1667 = vmatpush2.msra.mxu0 0.0
    %1668 = vmatprep.subr.mxu0 0.0
    %1669 = vmatpush2.msra.mxu0 0.0
    %1670 = vmatprep.subr.mxu0 0.0
    %1671 = vmatpush2.msra.mxu0 0.0
    %1672 = vmatprep.subr.mxu0 0.0
    %1673 = vmatpush2.msra.mxu0 0.0
    %1674 = vmatprep.subr.mxu0 0.0
    %1675 = vmatpush2.msra.mxu0 0.0
    %1676 = vmatprep.subr.mxu0 0.0
    %1677 = vmatpush2.msra.mxu0 0.0
    %1678 = vmatprep.subr.mxu0 0.0
    %1679 = vmatpush2.msra.mxu0 0.0
    %1680 = vmatprep.subr.mxu0 0.0
    %1681 = vmatpush2.msra.mxu0 0.0
    %1682 = vmatprep.subr.mxu0 0.0
    %1683 = vmatpush2.msra.mxu0 0.0
    %1684 = vmatprep.subr.mxu0 0.0
    %1685 = vmatpush2.msra.mxu0 0.0
    %1686 = vmatprep.subr.mxu0 0.0
    %1687 = vmatpush2.msra.mxu0 0.0
    %1688 = vmatprep.subr.mxu0 0.0
    %1689 = vmatpush2.msra.mxu0 0.0
    %1690 = vmatprep.subr.mxu0 0.0
    %1691 = vmatpush2.msra.mxu0 0.0
    %1692 = vmatprep.subr.mxu0 0.0
    %1693 = vmatpush2.msra.mxu0 0.0
    %1694 = vmatprep.subr.mxu0 0.0
    %1695 = vmatpush2.msra.mxu0 0.0
    %1696 = vmatprep.mubr.f32.mxu0 0.0
    %1697 = vmatmul.mubr.f32.gmra.mxu0 %v1630
    %v1698 = vpop.f32.mrf.mxu0
    %v1699 = vadd.f32 0.0, %v1698
    %v1700 = vpop.f32.mrf.mxu0
    %1701 = vdwg.mxu0
    %v1702 = vadd.f32 %v1627, %v1699
    %v1703 = vtanh.pop %v1702
    %v1704 = vxor.u32 %v1702, 2147483648
    %v1705 = vmul.f32 %v1704, 1.442695
    %v1706 = vpow.pop %v1705
    %v1707 = vadd.f32 %v1706, 1.0
    %v1708 = vrcp.pop %v1707
    %v1709 = vmul.f32 1.0, %v1708
    %v1710 = vsel %vm66, %v1703, %v1709
    %v1711 = vmul.f32 %v1710, %v1608
    %1713 = vrot.lane.b32.xlu0 %v1710, 64
    %v1714 = vpop.permute.xlu0 %1713
    %v1716 = vmul.f32 %v1710, %v1714
    %1718 = vrot.lane.b32.xlu0 %v1716, 32
    %v1719 = vpop.permute.xlu0 %1718
    %v1721 = vadd.f32 %v1711, %v1719
    %v1722 = vtanh.pop %v1721
    %1724 = vrot.lane.b32.xlu0 %v1722, 64
    %v1725 = vpop.permute.xlu0 %1724
    %v1727 = vmul.f32 %v1710, %v1725
    %v1730 = vunpack.c.l.s4 1983009808
    %v1731 = vunpack.c.0.s8 %v1730
    %v1732 = vlaneseq
    %v1733 = vshrl.u32 %v1732, 7
    %v1734 = vsub.s32 %v1731, %v1733
    %v1735 = vrot.slane %v1727, %v1734
    %1736 = vrot.lane.b32.xlu0 %v1735, 96
    %v1737 = vpop.permute.xlu0 %1736
    %1739 = vst.msk [vmem:[#allocation9 + $0x6] sm:$0x3] %vm411, %v1737
    %v1740 = vld [vmem:[#allocation4 + $0x1e] sm:$0x3]
    %1741 = vrot.lane.b32.xlu0 %v1727, 32
    %v1742 = vpop.permute.xlu0 %1741
    %v1743 = vsel %vm68, %v1742, 0
    %1745 = vmatprep.subr.mxu0 0.0
    %1746 = vmatpush1.msra.mxu0 0.0
    %1747 = vmatprep.subr.mxu0 0.0
    %1748 = vmatpush1.msra.mxu0 0.0
    %1749 = vmatprep.subr.mxu0 0.0
    %1750 = vmatpush1.msra.mxu0 0.0
    %1751 = vmatprep.subr.mxu0 0.0
    %1752 = vmatpush1.msra.mxu0 0.0
    %1753 = vmatprep.subr.mxu0 0.0
    %1754 = vmatpush1.msra.mxu0 0.0
    %1755 = vmatprep.subr.mxu0 0.0
    %1756 = vmatpush1.msra.mxu0 0.0
    %1757 = vmatprep.subr.mxu0 0.0
    %1758 = vmatpush1.msra.mxu0 0.0
    %1759 = vmatprep.subr.mxu0 0.0
    %1760 = vmatpush1.msra.mxu0 0.0
    %1761 = vmatprep.subr.mxu0 0.0
    %1762 = vmatpush1.msra.mxu0 0.0
    %1763 = vmatprep.subr.mxu0 0.0
    %1764 = vmatpush1.msra.mxu0 0.0
    %1765 = vmatprep.subr.mxu0 0.0
    %1766 = vmatpush1.msra.mxu0 0.0
    %1767 = vmatprep.subr.mxu0 0.0
    %1768 = vmatpush1.msra.mxu0 0.0
    %1769 = vmatprep.subr.mxu0 0.0
    %1770 = vmatpush1.msra.mxu0 %v59
    %1771 = vmatprep.subr.mxu0 0.0
    %1772 = vmatpush1.msra.mxu0 %v58
    %1773 = vmatprep.subr.mxu0 0.0
    %1774 = vmatpush1.msra.mxu0 %v57
    %1775 = vmatprep.subr.mxu0 0.0
    %1776 = vmatpush1.msra.mxu0 %v56
    %1777 = vmatprep.subr.mxu0 0.0
    %1778 = vmatpush2.msra.mxu0 0.0
    %1779 = vmatprep.subr.mxu0 0.0
    %1780 = vmatpush2.msra.mxu0 0.0
    %1781 = vmatprep.subr.mxu0 0.0
    %1782 = vmatpush2.msra.mxu0 0.0
    %1783 = vmatprep.subr.mxu0 0.0
    %1784 = vmatpush2.msra.mxu0 0.0
    %1785 = vmatprep.subr.mxu0 0.0
    %1786 = vmatpush2.msra.mxu0 0.0
    %1787 = vmatprep.subr.mxu0 0.0
    %1788 = vmatpush2.msra.mxu0 0.0
    %1789 = vmatprep.subr.mxu0 0.0
    %1790 = vmatpush2.msra.mxu0 0.0
    %1791 = vmatprep.subr.mxu0 0.0
    %1792 = vmatpush2.msra.mxu0 0.0
    %1793 = vmatprep.subr.mxu0 0.0
    %1794 = vmatpush2.msra.mxu0 0.0
    %1795 = vmatprep.subr.mxu0 0.0
    %1796 = vmatpush2.msra.mxu0 0.0
    %1797 = vmatprep.subr.mxu0 0.0
    %1798 = vmatpush2.msra.mxu0 0.0
    %1799 = vmatprep.subr.mxu0 0.0
    %1800 = vmatpush2.msra.mxu0 0.0
    %1801 = vmatprep.subr.mxu0 0.0
    %1802 = vmatpush2.msra.mxu0 0.0
    %1803 = vmatprep.subr.mxu0 0.0
    %1804 = vmatpush2.msra.mxu0 0.0
    %1805 = vmatprep.subr.mxu0 0.0
    %1806 = vmatpush2.msra.mxu0 0.0
    %1807 = vmatprep.subr.mxu0 0.0
    %1808 = vmatpush2.msra.mxu0 0.0
    %1809 = vmatprep.mubr.f32.mxu0 0.0
    %1810 = vmatmul.mubr.f32.gmra.mxu0 %v1743
    %v1811 = vpop.f32.mrf.mxu0
    %v1812 = vadd.f32 0.0, %v1811
    %v1813 = vpop.f32.mrf.mxu0
    %1814 = vdwg.mxu0
    %v1815 = vadd.f32 %v1740, %v1812
    %v1816 = vtanh.pop %v1815
    %v1817 = vxor.u32 %v1815, 2147483648
    %v1818 = vmul.f32 %v1817, 1.442695
    %v1819 = vpow.pop %v1818
    %v1820 = vadd.f32 %v1819, 1.0
    %v1821 = vrcp.pop %v1820
    %v1822 = vmul.f32 1.0, %v1821
    %v1823 = vsel %vm66, %v1816, %v1822
    %v1824 = vmul.f32 %v1823, %v1721
    %1826 = vrot.lane.b32.xlu0 %v1823, 64
    %v1827 = vpop.permute.xlu0 %1826
    %v1829 = vmul.f32 %v1823, %v1827
    %1831 = vrot.lane.b32.xlu0 %v1829, 32
    %v1832 = vpop.permute.xlu0 %1831
    %v1834 = vadd.f32 %v1824, %v1832
    %v1835 = vtanh.pop %v1834
    %1837 = vrot.lane.b32.xlu0 %v1835, 64
    %v1838 = vpop.permute.xlu0 %1837
    %v1840 = vmul.f32 %v1823, %v1838
    %1841 = vst.msk [vmem:[#allocation9 + $0x6] sm:$0x3] %vm514, %v1840
    %1843 = vrot.lane.b32.xlu0 %v1840, 32
    %v1844 = vpop.permute.xlu0 %1843
    %1846 = vst.msk [vmem:[#allocation2] sm:$0x3] %vm183, %v1844
    %1848 = vrot.lane.b32.xlu0 %v1834, 96
    %v1849 = vpop.permute.xlu0 %1848
    %1851 = vst.msk [vmem:[#allocation3] sm:$0x3] %vm183, %v1849
    %1852 = vst.msk [vmem:[#allocation10] sm:$0x3] %vm183, %v1849
    // Predicated region
    $region30: #{tpu_custom_call.1} parent=1 // pred_check
      _
    $region31: #{tpu_custom_call.1} parent=1 // pred_check_branch
      %1854 = sbr.rel (0) target = $region33
    $region32: #{tpu_custom_call.1} parent=1 // pred_region
      %s1856 = ssub.s32 128, 128
      %1857 = vsyncadd [#allocation6], %s1856
      %s1859 = sshll.u32 [#allocation9], 4
      %s1860 = int_to_ptr.vmem [resolvable:$true] %s1859
      %1862 = dma.vmem_to_hbm [thread:$0]  %s1860, 128, %s4, [#allocation6]
    $region33: #{tpu_custom_call.1} parent=1 // pred_fallthru
      _
    // Predicated region
    $region34: #{tpu_custom_call.1} parent=1 // pred_check
      _
    $region35: #{tpu_custom_call.1} parent=1 // pred_check_branch
      %1864 = sbr.rel (0) target = $region37
    $region36: #{tpu_custom_call.1} parent=1 // pred_region
      %s1866 = ssub.s32 32, 32
      %1867 = vsyncadd [#allocation11], %s1866
      %s1869 = sshll.u32 [#allocation10], 4
      %s1870 = int_to_ptr.vmem [resolvable:$true] %s1869
      %1872 = dma.vmem_to_hbm [thread:$0]  %s1870, 32, %s5, [#allocation11]
    $region37: #{tpu_custom_call.1} parent=1 // pred_fallthru
      _
    // Predicated region
    $region38: #{tpu_custom_call.1} parent=1 // pred_check
      _
    $region39: #{tpu_custom_call.1} parent=1 // pred_check_branch
      %1874 = sbr.rel (0) target = $region41
    $region40: #{tpu_custom_call.1} parent=1 // pred_region
      %1875 = dma.done [#allocation6], 128
    $region41: #{tpu_custom_call.1} parent=1 // pred_fallthru
      _
    // Predicated region
    $region42: #{tpu_custom_call.1} parent=1 // pred_check
      _
    $region43: #{tpu_custom_call.1} parent=1 // pred_check_branch
      %1877 = sbr.rel (0) target = $region45
    $region44: #{tpu_custom_call.1} parent=1 // pred_region
      %1878 = dma.done [#allocation11], 32
    $region45: #{tpu_custom_call.1} parent=1 // pred_fallthru
      _
    %1879 = vsyncpa [#allocation5], 1
    %1880 = vsyncpa [#allocation8], 1
    %1881 = vsyncpa [#allocation6], 1
    %1882 = vsyncpa [#allocation11], 1

</llo_original>
